<compile_context>
chip_gen: v7x
topology: tpu7x:2x2x1
jax: 0.10.0
libtpu: 0.0.40
codegen_flags: <defaults>
</compile_context>

<pallas_src>
import jax
import jax.numpy as jnp
from jax.experimental import pallas as pl
from jax.experimental.pallas import tpu as pltpu

EPS = 1e-5


def _make_stage_block_kernel(Cin, Cout, H, W, has_skip):
    """Build a StageBlock kernel specialized (at trace time) for the skip mode."""

    def kernel(x_ref, dw_ref, b1_ref, ew_ref, b2_ref, *rest):
        # x_ref  : (1, Cin, H, W)  VMEM input block (one batch element)
        # dw_ref : (Cin, 9)        SMEM depthwise taps (BN1 scale folded in), k = ky*3+kx
        # b1_ref : (Cin,)          SMEM folded BN1 bias
        # ew_ref : (Cin, Cout)     SMEM 1x1 expansion weights (BN2 scale folded in)
        # b2_ref : (Cout,)         SMEM folded BN2 bias
        # skw_ref: (Cin, Cout)     SMEM 1x1 skip-conv weights (only if has_skip)
        # out_ref: (1, Cout, H, W) VMEM output block
        if has_skip:
            skw_ref, out_ref = rest
        else:
            (out_ref,) = rest

        # Hoisted constants (no per-iteration broadcast materialization).
        zero_row = jnp.zeros((1, W), jnp.float32)
        zero_col = jnp.zeros((H, 1), jnp.float32)

        z = [None] * Cout    # expansion-conv accumulators, one (H, W) plane per co
        sk = [None] * Cout   # skip-path accumulators

        for ci in range(Cin):
            xc = x_ref[0, ci]                                          # (H, W) plane

            # +/-1 shifts along W (lane axis), zero at the image border.
            xl = jnp.concatenate([zero_col, xc[:, : W - 1]], axis=1)   # x[:, j-1]
            xr = jnp.concatenate([xc[:, 1:], zero_col], axis=1)        # x[:, j+1]

            # Fold the three kx taps on the lane axis first:
            #   q[ky][m, j] = sum_kx w[ky, kx] * x[m, j + kx - 1]
            q = []
            for ky in range(3):
                k0 = 3 * ky
                q.append(dw_ref[ci, k0] * xl
                         + dw_ref[ci, k0 + 1] * xc
                         + dw_ref[ci, k0 + 2] * xr)

            # Combine the three rows with +/-1 shifts along H (sublane axis):
            #   conv[i, j] = q[0][i-1, j] + q[1][i, j] + q[2][i+1, j]
            acc = q[1]
            acc = acc + jnp.concatenate([zero_row, q[0][: H - 1, :]], axis=0)
            acc = acc + jnp.concatenate([q[2][1:, :], zero_row], axis=0)

            # Folded BN1 bias + ReLU (BN1 scale already folded into dw).
            y = jnp.maximum(acc + b1_ref[ci], 0.0)

            # 1x1 expansion conv (with folded BN2 scale), unrolled on the VPU.
            for co in range(Cout):
                t = y * ew_ref[ci, co]
                z[co] = t if z[co] is None else z[co] + t

            if has_skip:
                # 1x1 skip conv, also unrolled scalar*plane MACs.
                for co in range(Cout):
                    t = xc * skw_ref[ci, co]
                    sk[co] = t if sk[co] is None else sk[co] + t
            else:
                # Identity skip (Cin == Cout): no matmul, just reuse the input plane.
                sk[ci] = xc

        for co in range(Cout):
            res = jnp.maximum(z[co] + b2_ref[co] + sk[co], 0.0)
            out_ref[0, co] = res.astype(out_ref.dtype)

    return kernel


def stage_block_pallas(x_nchw, params, stride=1):
    """StageBlock forward (inference-mode BN). x_nchw: (N, Cin, H, W) float32."""
    assert stride == 1, "TODO(synk): stride != 1 not implemented"
    N, Cin, H, W = x_nchw.shape
    Cout = params["e_w"].shape[0]
    has_skip = params["skip_w"] is not None
    if not has_skip:
        assert Cin == Cout, "identity skip requires in_channels == out_channels"

    # ---- fold BatchNorm (inference mode) into conv weights / biases ----
    s1 = params["bn1_g"] * jax.lax.rsqrt(params["bn1_v"] + EPS)        # (Cin,)
    b1 = params["bn1_b"] - params["bn1_m"] * s1                         # (Cin,)
    dw = params["d_w"][:, 0, :, :].reshape(Cin, 9) * s1[:, None]        # (Cin, 9)
    s2 = params["bn2_g"] * jax.lax.rsqrt(params["bn2_v"] + EPS)         # (Cout,)
    b2 = params["bn2_b"] - params["bn2_m"] * s2                         # (Cout,)
    ew = params["e_w"][:, :, 0, 0].T * s2[None, :]                      # (Cin, Cout)

    args = [x_nchw,
            dw.astype(jnp.float32), b1.astype(jnp.float32),
            ew.astype(jnp.float32), b2.astype(jnp.float32)]
    smem_spec = pl.BlockSpec(memory_space=pltpu.MemorySpace.SMEM)
    in_specs = [pl.BlockSpec((1, Cin, H, W), lambda n: (n, 0, 0, 0)),
                smem_spec, smem_spec, smem_spec, smem_spec]
    if has_skip:
        args.append(params["skip_w"][:, :, 0, 0].T.astype(jnp.float32))  # (Cin, Cout)
        in_specs.append(smem_spec)

    # Explicit VMEM budget: double-buffered (input + output) blocks + headroom.
    # Kept well below v7x's 64 MiB physical VMEM.
    block_bytes = 4 * H * W * (Cin + Cout)
    vmem_limit = int(min(48 * 1024 * 1024, max(16 * 1024 * 1024, 8 * block_bytes)))

    skip_flops = 2 * N * H * W * Cin * Cout if has_skip else N * H * W * Cout
    weight_bytes = 4 * (dw.size + b1.size + ew.size + b2.size
                        + (Cin * Cout if has_skip else 0))
    cost = pl.CostEstimate(
        flops=18 * N * H * W * Cin + 2 * N * H * W * Cin * Cout + skip_flops,
        transcendentals=0,
        bytes_accessed=4 * (x_nchw.size + N * Cout * H * W) + weight_bytes,
    )

    kernel = _make_stage_block_kernel(Cin, Cout, H, W, has_skip)
    return pl.pallas_call(
        kernel,
        out_shape=jax.ShapeDtypeStruct((N, Cout, H, W), x_nchw.dtype),
        grid_spec=pltpu.PrefetchScalarGridSpec(
            num_scalar_prefetch=0,
            grid=(N,),
            in_specs=in_specs,
            out_specs=pl.BlockSpec((1, Cout, H, W), lambda n: (n, 0, 0, 0)),
        ),
        compiler_params=pltpu.CompilerParams(
            dimension_semantics=("parallel",),
            vmem_limit_bytes=vmem_limit,
        ),
        cost_estimate=cost,
    )(*args)


def stage_block_reference(x_nchw, params, stride=1):
    """Pure-JAX reference matching the PyTorch forward (BN in eval mode)."""
    Cin = x_nchw.shape[1]
    y = jax.lax.conv_general_dilated(
        x_nchw, params["d_w"], window_strides=(stride, stride),
        padding=((1, 1), (1, 1)), feature_group_count=Cin,
        dimension_numbers=("NCHW", "OIHW", "NCHW"))
    s1 = params["bn1_g"] / jnp.sqrt(params["bn1_v"] + EPS)
    b1 = params["bn1_b"] - params["bn1_m"] * s1
    y = y * s1[None, :, None, None] + b1[None, :, None, None]
    y = jnp.maximum(y, 0.0)
    z = jax.lax.conv_general_dilated(
        y, params["e_w"], window_strides=(1, 1), padding="VALID",
        dimension_numbers=("NCHW", "OIHW", "NCHW"))
    s2 = params["bn2_g"] / jnp.sqrt(params["bn2_v"] + EPS)
    b2 = params["bn2_b"] - params["bn2_m"] * s2
    z = z * s2[None, :, None, None] + b2[None, :, None, None]
    if params["skip_w"] is None:
        identity = x_nchw
    else:
        identity = jax.lax.conv_general_dilated(
            x_nchw, params["skip_w"], window_strides=(stride, stride),
            padding="VALID", dimension_numbers=("NCHW", "OIHW", "NCHW"))
    return jnp.maximum(z + identity, 0.0)


def make_params(key, in_channels, out_channels, stride=1):
    ks = jax.random.split(key, 8)
    p = {
        "d_w": 0.1 * jax.random.normal(ks[0], (in_channels, 1, 3, 3), jnp.float32),
        "bn1_g": 1.0 + 0.1 * jax.random.normal(ks[1], (in_channels,), jnp.float32),
        "bn1_b": 0.1 * jax.random.normal(ks[2], (in_channels,), jnp.float32),
        "bn1_m": 0.05 * jax.random.normal(ks[3], (in_channels,), jnp.float32),
        "bn1_v": 1.0 + 0.1 * jnp.abs(jax.random.normal(ks[4], (in_channels,), jnp.float32)),
        "e_w": 0.1 * jax.random.normal(ks[5], (out_channels, in_channels, 1, 1), jnp.float32),
        "bn2_g": 1.0 + 0.1 * jax.random.normal(ks[6], (out_channels,), jnp.float32),
        "bn2_b": 0.1 * jax.random.normal(ks[7], (out_channels,), jnp.float32),
        "bn2_m": 0.05 * jnp.arange(out_channels, dtype=jnp.float32) / out_channels,
        "bn2_v": 1.0 + 0.01 * jnp.arange(out_channels, dtype=jnp.float32),
    }
    if stride != 1 or in_channels != out_channels:
        p["skip_w"] = 0.1 * jax.random.normal(
            jax.random.PRNGKey(42), (out_channels, in_channels, 1, 1), jnp.float32)
    else:
        p["skip_w"] = None
    return p


if __name__ == "__main__":
    key = jax.random.PRNGKey(0)
    kx1, kx2, kp1, kp2 = jax.random.split(key, 4)

    # Case 1: Cin != Cout -> 1x1 skip-conv path.
    N, Cin, Cout, H, W = 2, 4, 8, 16, 16
    x1 = jax.random.normal(kx1, (N, Cin, H, W), jnp.float32)
    p1 = make_params(kp1, Cin, Cout, stride=1)
    out1 = jax.block_until_ready(stage_block_pallas(x1, p1, stride=1))
    ref1 = stage_block_reference(x1, p1, stride=1)
    assert out1.shape == (N, Cout, H, W)
    assert jnp.allclose(out1, ref1, atol=1e-4, rtol=1e-4), "mismatch (skip-conv case)"

    # Case 2: Cin == Cout -> identity skip (no skip matmul / no eye matrix in the kernel).
    C = 8
    x2 = jax.random.normal(kx2, (N, C, H, W), jnp.float32)
    p2 = make_params(kp2, C, C, stride=1)
    out2 = jax.block_until_ready(stage_block_pallas(x2, p2, stride=1))
    ref2 = stage_block_reference(x2, p2, stride=1)
    assert out2.shape == (N, C, H, W)
    assert jnp.allclose(out2, ref2, atol=1e-4, rtol=1e-4), "mismatch (identity-skip case)"

    print("KERNEL_OK")
</pallas_src>

<mosaic_0001>
module attributes {stable_mosaic.version = 11 : i64} {
  func.func @kernel(%arg0: i32, %arg1: memref<1x4x16x16xf32, #tpu.memory_space<vmem>>, %arg2: memref<4x9xf32, #tpu.memory_space<smem>>, %arg3: memref<4xf32, #tpu.memory_space<smem>>, %arg4: memref<4x8xf32, #tpu.memory_space<smem>>, %arg5: memref<8xf32, #tpu.memory_space<smem>>, %arg6: memref<4x8xf32, #tpu.memory_space<smem>>, %arg7: memref<1x8x16x16xf32, #tpu.memory_space<vmem>>) attributes {dimension_semantics = [#tpu.dimension_semantics<parallel>], iteration_bounds = array<i64: 2>, scalar_prefetch = 0 : i64, scratch_operands = 0 : i64, tpu.core_type = #tpu.core_type<tc>, window_params = [{transform_indices = @transform_0, window_bounds = array<i64: 1, 4, 16, 16>}, {transform_indices = @transform_1, window_bounds = array<i64: 4, 9>}, {transform_indices = @transform_2, window_bounds = array<i64: 4>}, {transform_indices = @transform_3, window_bounds = array<i64: 4, 8>}, {transform_indices = @transform_4, window_bounds = array<i64: 8>}, {transform_indices = @transform_5, window_bounds = array<i64: 4, 8>}, {transform_indices = @transform_6, window_bounds = array<i64: 1, 8, 16, 16>}]} {
    %cst = arith.constant 0.000000e+00 : f32
    %0 = vector.broadcast %cst : f32 to vector<1x16xf32>
    %cst_0 = arith.constant 0.000000e+00 : f32
    %1 = vector.broadcast %cst_0 : f32 to vector<16x1xf32>
    %c0 = arith.constant 0 : index
    %c0_1 = arith.constant 0 : index
    %c0_2 = arith.constant 0 : index
    %c0_3 = arith.constant 0 : index
    %2 = vector.load %arg1[%c0, %c0_1, %c0_2, %c0_3] : memref<1x4x16x16xf32, #tpu.memory_space<vmem>>, vector<1x1x16x16xf32>
    %3 = vector.shape_cast %2 : vector<1x1x16x16xf32> to vector<16x16xf32>
    %4 = vector.extract_strided_slice %3 {offsets = [0, 0], sizes = [16, 15], strides = [1, 1]} : vector<16x16xf32> to vector<16x15xf32>
    %5 = tpu.concatenate %1, %4 in 1 : vector<16x1xf32>, vector<16x15xf32> -> vector<16x16xf32>
    %6 = vector.extract_strided_slice %3 {offsets = [0, 1], sizes = [16, 15], strides = [1, 1]} : vector<16x16xf32> to vector<16x15xf32>
    %7 = tpu.concatenate %6, %1 in 1 : vector<16x15xf32>, vector<16x1xf32> -> vector<16x16xf32>
    %c0_4 = arith.constant 0 : index
    %c0_5 = arith.constant 0 : index
    %8 = memref.load %arg2[%c0_4, %c0_5] : memref<4x9xf32, #tpu.memory_space<smem>>
    %9 = vector.broadcast %8 : f32 to vector<16x16xf32>
    %10 = arith.mulf %9, %5 : vector<16x16xf32>
    %c0_6 = arith.constant 0 : index
    %c1 = arith.constant 1 : index
    %11 = memref.load %arg2[%c0_6, %c1] : memref<4x9xf32, #tpu.memory_space<smem>>
    %12 = vector.broadcast %11 : f32 to vector<16x16xf32>
    %13 = arith.mulf %12, %3 : vector<16x16xf32>
    %14 = arith.addf %10, %13 : vector<16x16xf32>
    %c0_7 = arith.constant 0 : index
    %c2 = arith.constant 2 : index
    %15 = memref.load %arg2[%c0_7, %c2] : memref<4x9xf32, #tpu.memory_space<smem>>
    %16 = vector.broadcast %15 : f32 to vector<16x16xf32>
    %17 = arith.mulf %16, %7 : vector<16x16xf32>
    %18 = arith.addf %14, %17 : vector<16x16xf32>
    %c0_8 = arith.constant 0 : index
    %c3 = arith.constant 3 : index
    %19 = memref.load %arg2[%c0_8, %c3] : memref<4x9xf32, #tpu.memory_space<smem>>
    %20 = vector.broadcast %19 : f32 to vector<16x16xf32>
    %21 = arith.mulf %20, %5 : vector<16x16xf32>
    %c0_9 = arith.constant 0 : index
    %c4 = arith.constant 4 : index
    %22 = memref.load %arg2[%c0_9, %c4] : memref<4x9xf32, #tpu.memory_space<smem>>
    %23 = vector.broadcast %22 : f32 to vector<16x16xf32>
    %24 = arith.mulf %23, %3 : vector<16x16xf32>
    %25 = arith.addf %21, %24 : vector<16x16xf32>
    %c0_10 = arith.constant 0 : index
    %c5 = arith.constant 5 : index
    %26 = memref.load %arg2[%c0_10, %c5] : memref<4x9xf32, #tpu.memory_space<smem>>
    %27 = vector.broadcast %26 : f32 to vector<16x16xf32>
    %28 = arith.mulf %27, %7 : vector<16x16xf32>
    %29 = arith.addf %25, %28 : vector<16x16xf32>
    %c0_11 = arith.constant 0 : index
    %c6 = arith.constant 6 : index
    %30 = memref.load %arg2[%c0_11, %c6] : memref<4x9xf32, #tpu.memory_space<smem>>
    %31 = vector.broadcast %30 : f32 to vector<16x16xf32>
    %32 = arith.mulf %31, %5 : vector<16x16xf32>
    %c0_12 = arith.constant 0 : index
    %c7 = arith.constant 7 : index
    %33 = memref.load %arg2[%c0_12, %c7] : memref<4x9xf32, #tpu.memory_space<smem>>
    %34 = vector.broadcast %33 : f32 to vector<16x16xf32>
    %35 = arith.mulf %34, %3 : vector<16x16xf32>
    %36 = arith.addf %32, %35 : vector<16x16xf32>
    %c0_13 = arith.constant 0 : index
    %c8 = arith.constant 8 : index
    %37 = memref.load %arg2[%c0_13, %c8] : memref<4x9xf32, #tpu.memory_space<smem>>
    %38 = vector.broadcast %37 : f32 to vector<16x16xf32>
    %39 = arith.mulf %38, %7 : vector<16x16xf32>
    %40 = arith.addf %36, %39 : vector<16x16xf32>
    %41 = vector.extract_strided_slice %18 {offsets = [0, 0], sizes = [15, 16], strides = [1, 1]} : vector<16x16xf32> to vector<15x16xf32>
    %42 = tpu.concatenate %0, %41 in 0 : vector<1x16xf32>, vector<15x16xf32> -> vector<16x16xf32>
    %43 = arith.addf %29, %42 : vector<16x16xf32>
    %44 = vector.extract_strided_slice %40 {offsets = [1, 0], sizes = [15, 16], strides = [1, 1]} : vector<16x16xf32> to vector<15x16xf32>
    %45 = tpu.concatenate %44, %0 in 0 : vector<15x16xf32>, vector<1x16xf32> -> vector<16x16xf32>
    %46 = arith.addf %43, %45 : vector<16x16xf32>
    %c0_14 = arith.constant 0 : index
    %47 = memref.load %arg3[%c0_14] : memref<4xf32, #tpu.memory_space<smem>>
    %48 = vector.broadcast %47 : f32 to vector<16x16xf32>
    %49 = arith.addf %46, %48 : vector<16x16xf32>
    %cst_15 = arith.constant 0.000000e+00 : f32
    %50 = vector.broadcast %cst_15 : f32 to vector<16x16xf32>
    %51 = arith.maximumf %49, %50 : vector<16x16xf32>
    %c0_16 = arith.constant 0 : index
    %c0_17 = arith.constant 0 : index
    %52 = memref.load %arg4[%c0_16, %c0_17] : memref<4x8xf32, #tpu.memory_space<smem>>
    %53 = vector.broadcast %52 : f32 to vector<16x16xf32>
    %54 = arith.mulf %51, %53 : vector<16x16xf32>
    %c0_18 = arith.constant 0 : index
    %c1_19 = arith.constant 1 : index
    %55 = memref.load %arg4[%c0_18, %c1_19] : memref<4x8xf32, #tpu.memory_space<smem>>
    %56 = vector.broadcast %55 : f32 to vector<16x16xf32>
    %57 = arith.mulf %51, %56 : vector<16x16xf32>
    %c0_20 = arith.constant 0 : index
    %c2_21 = arith.constant 2 : index
    %58 = memref.load %arg4[%c0_20, %c2_21] : memref<4x8xf32, #tpu.memory_space<smem>>
    %59 = vector.broadcast %58 : f32 to vector<16x16xf32>
    %60 = arith.mulf %51, %59 : vector<16x16xf32>
    %c0_22 = arith.constant 0 : index
    %c3_23 = arith.constant 3 : index
    %61 = memref.load %arg4[%c0_22, %c3_23] : memref<4x8xf32, #tpu.memory_space<smem>>
    %62 = vector.broadcast %61 : f32 to vector<16x16xf32>
    %63 = arith.mulf %51, %62 : vector<16x16xf32>
    %c0_24 = arith.constant 0 : index
    %c4_25 = arith.constant 4 : index
    %64 = memref.load %arg4[%c0_24, %c4_25] : memref<4x8xf32, #tpu.memory_space<smem>>
    %65 = vector.broadcast %64 : f32 to vector<16x16xf32>
    %66 = arith.mulf %51, %65 : vector<16x16xf32>
    %c0_26 = arith.constant 0 : index
    %c5_27 = arith.constant 5 : index
    %67 = memref.load %arg4[%c0_26, %c5_27] : memref<4x8xf32, #tpu.memory_space<smem>>
    %68 = vector.broadcast %67 : f32 to vector<16x16xf32>
    %69 = arith.mulf %51, %68 : vector<16x16xf32>
    %c0_28 = arith.constant 0 : index
    %c6_29 = arith.constant 6 : index
    %70 = memref.load %arg4[%c0_28, %c6_29] : memref<4x8xf32, #tpu.memory_space<smem>>
    %71 = vector.broadcast %70 : f32 to vector<16x16xf32>
    %72 = arith.mulf %51, %71 : vector<16x16xf32>
    %c0_30 = arith.constant 0 : index
    %c7_31 = arith.constant 7 : index
    %73 = memref.load %arg4[%c0_30, %c7_31] : memref<4x8xf32, #tpu.memory_space<smem>>
    %74 = vector.broadcast %73 : f32 to vector<16x16xf32>
    %75 = arith.mulf %51, %74 : vector<16x16xf32>
    %c0_32 = arith.constant 0 : index
    %c0_33 = arith.constant 0 : index
    %76 = memref.load %arg6[%c0_32, %c0_33] : memref<4x8xf32, #tpu.memory_space<smem>>
    %77 = vector.broadcast %76 : f32 to vector<16x16xf32>
    %78 = arith.mulf %3, %77 : vector<16x16xf32>
    %c0_34 = arith.constant 0 : index
    %c1_35 = arith.constant 1 : index
    %79 = memref.load %arg6[%c0_34, %c1_35] : memref<4x8xf32, #tpu.memory_space<smem>>
    %80 = vector.broadcast %79 : f32 to vector<16x16xf32>
    %81 = arith.mulf %3, %80 : vector<16x16xf32>
    %c0_36 = arith.constant 0 : index
    %c2_37 = arith.constant 2 : index
    %82 = memref.load %arg6[%c0_36, %c2_37] : memref<4x8xf32, #tpu.memory_space<smem>>
    %83 = vector.broadcast %82 : f32 to vector<16x16xf32>
    %84 = arith.mulf %3, %83 : vector<16x16xf32>
    %c0_38 = arith.constant 0 : index
    %c3_39 = arith.constant 3 : index
    %85 = memref.load %arg6[%c0_38, %c3_39] : memref<4x8xf32, #tpu.memory_space<smem>>
    %86 = vector.broadcast %85 : f32 to vector<16x16xf32>
    %87 = arith.mulf %3, %86 : vector<16x16xf32>
    %c0_40 = arith.constant 0 : index
    %c4_41 = arith.constant 4 : index
    %88 = memref.load %arg6[%c0_40, %c4_41] : memref<4x8xf32, #tpu.memory_space<smem>>
    %89 = vector.broadcast %88 : f32 to vector<16x16xf32>
    %90 = arith.mulf %3, %89 : vector<16x16xf32>
    %c0_42 = arith.constant 0 : index
    %c5_43 = arith.constant 5 : index
    %91 = memref.load %arg6[%c0_42, %c5_43] : memref<4x8xf32, #tpu.memory_space<smem>>
    %92 = vector.broadcast %91 : f32 to vector<16x16xf32>
    %93 = arith.mulf %3, %92 : vector<16x16xf32>
    %c0_44 = arith.constant 0 : index
    %c6_45 = arith.constant 6 : index
    %94 = memref.load %arg6[%c0_44, %c6_45] : memref<4x8xf32, #tpu.memory_space<smem>>
    %95 = vector.broadcast %94 : f32 to vector<16x16xf32>
    %96 = arith.mulf %3, %95 : vector<16x16xf32>
    %c0_46 = arith.constant 0 : index
    %c7_47 = arith.constant 7 : index
    %97 = memref.load %arg6[%c0_46, %c7_47] : memref<4x8xf32, #tpu.memory_space<smem>>
    %98 = vector.broadcast %97 : f32 to vector<16x16xf32>
    %99 = arith.mulf %3, %98 : vector<16x16xf32>
    %c0_48 = arith.constant 0 : index
    %c1_49 = arith.constant 1 : index
    %c0_50 = arith.constant 0 : index
    %c0_51 = arith.constant 0 : index
    %100 = vector.load %arg1[%c0_48, %c1_49, %c0_50, %c0_51] : memref<1x4x16x16xf32, #tpu.memory_space<vmem>>, vector<1x1x16x16xf32>
    %101 = vector.shape_cast %100 : vector<1x1x16x16xf32> to vector<16x16xf32>
    %102 = vector.extract_strided_slice %101 {offsets = [0, 0], sizes = [16, 15], strides = [1, 1]} : vector<16x16xf32> to vector<16x15xf32>
    %103 = tpu.concatenate %1, %102 in 1 : vector<16x1xf32>, vector<16x15xf32> -> vector<16x16xf32>
    %104 = vector.extract_strided_slice %101 {offsets = [0, 1], sizes = [16, 15], strides = [1, 1]} : vector<16x16xf32> to vector<16x15xf32>
    %105 = tpu.concatenate %104, %1 in 1 : vector<16x15xf32>, vector<16x1xf32> -> vector<16x16xf32>
    %c1_52 = arith.constant 1 : index
    %c0_53 = arith.constant 0 : index
    %106 = memref.load %arg2[%c1_52, %c0_53] : memref<4x9xf32, #tpu.memory_space<smem>>
    %107 = vector.broadcast %106 : f32 to vector<16x16xf32>
    %108 = arith.mulf %107, %103 : vector<16x16xf32>
    %c1_54 = arith.constant 1 : index
    %c1_55 = arith.constant 1 : index
    %109 = memref.load %arg2[%c1_54, %c1_55] : memref<4x9xf32, #tpu.memory_space<smem>>
    %110 = vector.broadcast %109 : f32 to vector<16x16xf32>
    %111 = arith.mulf %110, %101 : vector<16x16xf32>
    %112 = arith.addf %108, %111 : vector<16x16xf32>
    %c1_56 = arith.constant 1 : index
    %c2_57 = arith.constant 2 : index
    %113 = memref.load %arg2[%c1_56, %c2_57] : memref<4x9xf32, #tpu.memory_space<smem>>
    %114 = vector.broadcast %113 : f32 to vector<16x16xf32>
    %115 = arith.mulf %114, %105 : vector<16x16xf32>
    %116 = arith.addf %112, %115 : vector<16x16xf32>
    %c1_58 = arith.constant 1 : index
    %c3_59 = arith.constant 3 : index
    %117 = memref.load %arg2[%c1_58, %c3_59] : memref<4x9xf32, #tpu.memory_space<smem>>
    %118 = vector.broadcast %117 : f32 to vector<16x16xf32>
    %119 = arith.mulf %118, %103 : vector<16x16xf32>
    %c1_60 = arith.constant 1 : index
    %c4_61 = arith.constant 4 : index
    %120 = memref.load %arg2[%c1_60, %c4_61] : memref<4x9xf32, #tpu.memory_space<smem>>
    %121 = vector.broadcast %120 : f32 to vector<16x16xf32>
    %122 = arith.mulf %121, %101 : vector<16x16xf32>
    %123 = arith.addf %119, %122 : vector<16x16xf32>
    %c1_62 = arith.constant 1 : index
    %c5_63 = arith.constant 5 : index
    %124 = memref.load %arg2[%c1_62, %c5_63] : memref<4x9xf32, #tpu.memory_space<smem>>
    %125 = vector.broadcast %124 : f32 to vector<16x16xf32>
    %126 = arith.mulf %125, %105 : vector<16x16xf32>
    %127 = arith.addf %123, %126 : vector<16x16xf32>
    %c1_64 = arith.constant 1 : index
    %c6_65 = arith.constant 6 : index
    %128 = memref.load %arg2[%c1_64, %c6_65] : memref<4x9xf32, #tpu.memory_space<smem>>
    %129 = vector.broadcast %128 : f32 to vector<16x16xf32>
    %130 = arith.mulf %129, %103 : vector<16x16xf32>
    %c1_66 = arith.constant 1 : index
    %c7_67 = arith.constant 7 : index
    %131 = memref.load %arg2[%c1_66, %c7_67] : memref<4x9xf32, #tpu.memory_space<smem>>
    %132 = vector.broadcast %131 : f32 to vector<16x16xf32>
    %133 = arith.mulf %132, %101 : vector<16x16xf32>
    %134 = arith.addf %130, %133 : vector<16x16xf32>
    %c1_68 = arith.constant 1 : index
    %c8_69 = arith.constant 8 : index
    %135 = memref.load %arg2[%c1_68, %c8_69] : memref<4x9xf32, #tpu.memory_space<smem>>
    %136 = vector.broadcast %135 : f32 to vector<16x16xf32>
    %137 = arith.mulf %136, %105 : vector<16x16xf32>
    %138 = arith.addf %134, %137 : vector<16x16xf32>
    %139 = vector.extract_strided_slice %116 {offsets = [0, 0], sizes = [15, 16], strides = [1, 1]} : vector<16x16xf32> to vector<15x16xf32>
    %140 = tpu.concatenate %0, %139 in 0 : vector<1x16xf32>, vector<15x16xf32> -> vector<16x16xf32>
    %141 = arith.addf %127, %140 : vector<16x16xf32>
    %142 = vector.extract_strided_slice %138 {offsets = [1, 0], sizes = [15, 16], strides = [1, 1]} : vector<16x16xf32> to vector<15x16xf32>
    %143 = tpu.concatenate %142, %0 in 0 : vector<15x16xf32>, vector<1x16xf32> -> vector<16x16xf32>
    %144 = arith.addf %141, %143 : vector<16x16xf32>
    %c1_70 = arith.constant 1 : index
    %145 = memref.load %arg3[%c1_70] : memref<4xf32, #tpu.memory_space<smem>>
    %146 = vector.broadcast %145 : f32 to vector<16x16xf32>
    %147 = arith.addf %144, %146 : vector<16x16xf32>
    %cst_71 = arith.constant 0.000000e+00 : f32
    %148 = vector.broadcast %cst_71 : f32 to vector<16x16xf32>
    %149 = arith.maximumf %147, %148 : vector<16x16xf32>
    %c1_72 = arith.constant 1 : index
    %c0_73 = arith.constant 0 : index
    %150 = memref.load %arg4[%c1_72, %c0_73] : memref<4x8xf32, #tpu.memory_space<smem>>
    %151 = vector.broadcast %150 : f32 to vector<16x16xf32>
    %152 = arith.mulf %149, %151 : vector<16x16xf32>
    %153 = arith.addf %54, %152 : vector<16x16xf32>
    %c1_74 = arith.constant 1 : index
    %c1_75 = arith.constant 1 : index
    %154 = memref.load %arg4[%c1_74, %c1_75] : memref<4x8xf32, #tpu.memory_space<smem>>
    %155 = vector.broadcast %154 : f32 to vector<16x16xf32>
    %156 = arith.mulf %149, %155 : vector<16x16xf32>
    %157 = arith.addf %57, %156 : vector<16x16xf32>
    %c1_76 = arith.constant 1 : index
    %c2_77 = arith.constant 2 : index
    %158 = memref.load %arg4[%c1_76, %c2_77] : memref<4x8xf32, #tpu.memory_space<smem>>
    %159 = vector.broadcast %158 : f32 to vector<16x16xf32>
    %160 = arith.mulf %149, %159 : vector<16x16xf32>
    %161 = arith.addf %60, %160 : vector<16x16xf32>
    %c1_78 = arith.constant 1 : index
    %c3_79 = arith.constant 3 : index
    %162 = memref.load %arg4[%c1_78, %c3_79] : memref<4x8xf32, #tpu.memory_space<smem>>
    %163 = vector.broadcast %162 : f32 to vector<16x16xf32>
    %164 = arith.mulf %149, %163 : vector<16x16xf32>
    %165 = arith.addf %63, %164 : vector<16x16xf32>
    %c1_80 = arith.constant 1 : index
    %c4_81 = arith.constant 4 : index
    %166 = memref.load %arg4[%c1_80, %c4_81] : memref<4x8xf32, #tpu.memory_space<smem>>
    %167 = vector.broadcast %166 : f32 to vector<16x16xf32>
    %168 = arith.mulf %149, %167 : vector<16x16xf32>
    %169 = arith.addf %66, %168 : vector<16x16xf32>
    %c1_82 = arith.constant 1 : index
    %c5_83 = arith.constant 5 : index
    %170 = memref.load %arg4[%c1_82, %c5_83] : memref<4x8xf32, #tpu.memory_space<smem>>
    %171 = vector.broadcast %170 : f32 to vector<16x16xf32>
    %172 = arith.mulf %149, %171 : vector<16x16xf32>
    %173 = arith.addf %69, %172 : vector<16x16xf32>
    %c1_84 = arith.constant 1 : index
    %c6_85 = arith.constant 6 : index
    %174 = memref.load %arg4[%c1_84, %c6_85] : memref<4x8xf32, #tpu.memory_space<smem>>
    %175 = vector.broadcast %174 : f32 to vector<16x16xf32>
    %176 = arith.mulf %149, %175 : vector<16x16xf32>
    %177 = arith.addf %72, %176 : vector<16x16xf32>
    %c1_86 = arith.constant 1 : index
    %c7_87 = arith.constant 7 : index
    %178 = memref.load %arg4[%c1_86, %c7_87] : memref<4x8xf32, #tpu.memory_space<smem>>
    %179 = vector.broadcast %178 : f32 to vector<16x16xf32>
    %180 = arith.mulf %149, %179 : vector<16x16xf32>
    %181 = arith.addf %75, %180 : vector<16x16xf32>
    %c1_88 = arith.constant 1 : index
    %c0_89 = arith.constant 0 : index
    %182 = memref.load %arg6[%c1_88, %c0_89] : memref<4x8xf32, #tpu.memory_space<smem>>
    %183 = vector.broadcast %182 : f32 to vector<16x16xf32>
    %184 = arith.mulf %101, %183 : vector<16x16xf32>
    %185 = arith.addf %78, %184 : vector<16x16xf32>
    %c1_90 = arith.constant 1 : index
    %c1_91 = arith.constant 1 : index
    %186 = memref.load %arg6[%c1_90, %c1_91] : memref<4x8xf32, #tpu.memory_space<smem>>
    %187 = vector.broadcast %186 : f32 to vector<16x16xf32>
    %188 = arith.mulf %101, %187 : vector<16x16xf32>
    %189 = arith.addf %81, %188 : vector<16x16xf32>
    %c1_92 = arith.constant 1 : index
    %c2_93 = arith.constant 2 : index
    %190 = memref.load %arg6[%c1_92, %c2_93] : memref<4x8xf32, #tpu.memory_space<smem>>
    %191 = vector.broadcast %190 : f32 to vector<16x16xf32>
    %192 = arith.mulf %101, %191 : vector<16x16xf32>
    %193 = arith.addf %84, %192 : vector<16x16xf32>
    %c1_94 = arith.constant 1 : index
    %c3_95 = arith.constant 3 : index
    %194 = memref.load %arg6[%c1_94, %c3_95] : memref<4x8xf32, #tpu.memory_space<smem>>
    %195 = vector.broadcast %194 : f32 to vector<16x16xf32>
    %196 = arith.mulf %101, %195 : vector<16x16xf32>
    %197 = arith.addf %87, %196 : vector<16x16xf32>
    %c1_96 = arith.constant 1 : index
    %c4_97 = arith.constant 4 : index
    %198 = memref.load %arg6[%c1_96, %c4_97] : memref<4x8xf32, #tpu.memory_space<smem>>
    %199 = vector.broadcast %198 : f32 to vector<16x16xf32>
    %200 = arith.mulf %101, %199 : vector<16x16xf32>
    %201 = arith.addf %90, %200 : vector<16x16xf32>
    %c1_98 = arith.constant 1 : index
    %c5_99 = arith.constant 5 : index
    %202 = memref.load %arg6[%c1_98, %c5_99] : memref<4x8xf32, #tpu.memory_space<smem>>
    %203 = vector.broadcast %202 : f32 to vector<16x16xf32>
    %204 = arith.mulf %101, %203 : vector<16x16xf32>
    %205 = arith.addf %93, %204 : vector<16x16xf32>
    %c1_100 = arith.constant 1 : index
    %c6_101 = arith.constant 6 : index
    %206 = memref.load %arg6[%c1_100, %c6_101] : memref<4x8xf32, #tpu.memory_space<smem>>
    %207 = vector.broadcast %206 : f32 to vector<16x16xf32>
    %208 = arith.mulf %101, %207 : vector<16x16xf32>
    %209 = arith.addf %96, %208 : vector<16x16xf32>
    %c1_102 = arith.constant 1 : index
    %c7_103 = arith.constant 7 : index
    %210 = memref.load %arg6[%c1_102, %c7_103] : memref<4x8xf32, #tpu.memory_space<smem>>
    %211 = vector.broadcast %210 : f32 to vector<16x16xf32>
    %212 = arith.mulf %101, %211 : vector<16x16xf32>
    %213 = arith.addf %99, %212 : vector<16x16xf32>
    %c0_104 = arith.constant 0 : index
    %c2_105 = arith.constant 2 : index
    %c0_106 = arith.constant 0 : index
    %c0_107 = arith.constant 0 : index
    %214 = vector.load %arg1[%c0_104, %c2_105, %c0_106, %c0_107] : memref<1x4x16x16xf32, #tpu.memory_space<vmem>>, vector<1x1x16x16xf32>
    %215 = vector.shape_cast %214 : vector<1x1x16x16xf32> to vector<16x16xf32>
    %216 = vector.extract_strided_slice %215 {offsets = [0, 0], sizes = [16, 15], strides = [1, 1]} : vector<16x16xf32> to vector<16x15xf32>
    %217 = tpu.concatenate %1, %216 in 1 : vector<16x1xf32>, vector<16x15xf32> -> vector<16x16xf32>
    %218 = vector.extract_strided_slice %215 {offsets = [0, 1], sizes = [16, 15], strides = [1, 1]} : vector<16x16xf32> to vector<16x15xf32>
    %219 = tpu.concatenate %218, %1 in 1 : vector<16x15xf32>, vector<16x1xf32> -> vector<16x16xf32>
    %c2_108 = arith.constant 2 : index
    %c0_109 = arith.constant 0 : index
    %220 = memref.load %arg2[%c2_108, %c0_109] : memref<4x9xf32, #tpu.memory_space<smem>>
    %221 = vector.broadcast %220 : f32 to vector<16x16xf32>
    %222 = arith.mulf %221, %217 : vector<16x16xf32>
    %c2_110 = arith.constant 2 : index
    %c1_111 = arith.constant 1 : index
    %223 = memref.load %arg2[%c2_110, %c1_111] : memref<4x9xf32, #tpu.memory_space<smem>>
    %224 = vector.broadcast %223 : f32 to vector<16x16xf32>
    %225 = arith.mulf %224, %215 : vector<16x16xf32>
    %226 = arith.addf %222, %225 : vector<16x16xf32>
    %c2_112 = arith.constant 2 : index
    %c2_113 = arith.constant 2 : index
    %227 = memref.load %arg2[%c2_112, %c2_113] : memref<4x9xf32, #tpu.memory_space<smem>>
    %228 = vector.broadcast %227 : f32 to vector<16x16xf32>
    %229 = arith.mulf %228, %219 : vector<16x16xf32>
    %230 = arith.addf %226, %229 : vector<16x16xf32>
    %c2_114 = arith.constant 2 : index
    %c3_115 = arith.constant 3 : index
    %231 = memref.load %arg2[%c2_114, %c3_115] : memref<4x9xf32, #tpu.memory_space<smem>>
    %232 = vector.broadcast %231 : f32 to vector<16x16xf32>
    %233 = arith.mulf %232, %217 : vector<16x16xf32>
    %c2_116 = arith.constant 2 : index
    %c4_117 = arith.constant 4 : index
    %234 = memref.load %arg2[%c2_116, %c4_117] : memref<4x9xf32, #tpu.memory_space<smem>>
    %235 = vector.broadcast %234 : f32 to vector<16x16xf32>
    %236 = arith.mulf %235, %215 : vector<16x16xf32>
    %237 = arith.addf %233, %236 : vector<16x16xf32>
    %c2_118 = arith.constant 2 : index
    %c5_119 = arith.constant 5 : index
    %238 = memref.load %arg2[%c2_118, %c5_119] : memref<4x9xf32, #tpu.memory_space<smem>>
    %239 = vector.broadcast %238 : f32 to vector<16x16xf32>
    %240 = arith.mulf %239, %219 : vector<16x16xf32>
    %241 = arith.addf %237, %240 : vector<16x16xf32>
    %c2_120 = arith.constant 2 : index
    %c6_121 = arith.constant 6 : index
    %242 = memref.load %arg2[%c2_120, %c6_121] : memref<4x9xf32, #tpu.memory_space<smem>>
    %243 = vector.broadcast %242 : f32 to vector<16x16xf32>
    %244 = arith.mulf %243, %217 : vector<16x16xf32>
    %c2_122 = arith.constant 2 : index
    %c7_123 = arith.constant 7 : index
    %245 = memref.load %arg2[%c2_122, %c7_123] : memref<4x9xf32, #tpu.memory_space<smem>>
    %246 = vector.broadcast %245 : f32 to vector<16x16xf32>
    %247 = arith.mulf %246, %215 : vector<16x16xf32>
    %248 = arith.addf %244, %247 : vector<16x16xf32>
    %c2_124 = arith.constant 2 : index
    %c8_125 = arith.constant 8 : index
    %249 = memref.load %arg2[%c2_124, %c8_125] : memref<4x9xf32, #tpu.memory_space<smem>>
    %250 = vector.broadcast %249 : f32 to vector<16x16xf32>
    %251 = arith.mulf %250, %219 : vector<16x16xf32>
    %252 = arith.addf %248, %251 : vector<16x16xf32>
    %253 = vector.extract_strided_slice %230 {offsets = [0, 0], sizes = [15, 16], strides = [1, 1]} : vector<16x16xf32> to vector<15x16xf32>
    %254 = tpu.concatenate %0, %253 in 0 : vector<1x16xf32>, vector<15x16xf32> -> vector<16x16xf32>
    %255 = arith.addf %241, %254 : vector<16x16xf32>
    %256 = vector.extract_strided_slice %252 {offsets = [1, 0], sizes = [15, 16], strides = [1, 1]} : vector<16x16xf32> to vector<15x16xf32>
    %257 = tpu.concatenate %256, %0 in 0 : vector<15x16xf32>, vector<1x16xf32> -> vector<16x16xf32>
    %258 = arith.addf %255, %257 : vector<16x16xf32>
    %c2_126 = arith.constant 2 : index
    %259 = memref.load %arg3[%c2_126] : memref<4xf32, #tpu.memory_space<smem>>
    %260 = vector.broadcast %259 : f32 to vector<16x16xf32>
    %261 = arith.addf %258, %260 : vector<16x16xf32>
    %cst_127 = arith.constant 0.000000e+00 : f32
    %262 = vector.broadcast %cst_127 : f32 to vector<16x16xf32>
    %263 = arith.maximumf %261, %262 : vector<16x16xf32>
    %c2_128 = arith.constant 2 : index
    %c0_129 = arith.constant 0 : index
    %264 = memref.load %arg4[%c2_128, %c0_129] : memref<4x8xf32, #tpu.memory_space<smem>>
    %265 = vector.broadcast %264 : f32 to vector<16x16xf32>
    %266 = arith.mulf %263, %265 : vector<16x16xf32>
    %267 = arith.addf %153, %266 : vector<16x16xf32>
    %c2_130 = arith.constant 2 : index
    %c1_131 = arith.constant 1 : index
    %268 = memref.load %arg4[%c2_130, %c1_131] : memref<4x8xf32, #tpu.memory_space<smem>>
    %269 = vector.broadcast %268 : f32 to vector<16x16xf32>
    %270 = arith.mulf %263, %269 : vector<16x16xf32>
    %271 = arith.addf %157, %270 : vector<16x16xf32>
    %c2_132 = arith.constant 2 : index
    %c2_133 = arith.constant 2 : index
    %272 = memref.load %arg4[%c2_132, %c2_133] : memref<4x8xf32, #tpu.memory_space<smem>>
    %273 = vector.broadcast %272 : f32 to vector<16x16xf32>
    %274 = arith.mulf %263, %273 : vector<16x16xf32>
    %275 = arith.addf %161, %274 : vector<16x16xf32>
    %c2_134 = arith.constant 2 : index
    %c3_135 = arith.constant 3 : index
    %276 = memref.load %arg4[%c2_134, %c3_135] : memref<4x8xf32, #tpu.memory_space<smem>>
    %277 = vector.broadcast %276 : f32 to vector<16x16xf32>
    %278 = arith.mulf %263, %277 : vector<16x16xf32>
    %279 = arith.addf %165, %278 : vector<16x16xf32>
    %c2_136 = arith.constant 2 : index
    %c4_137 = arith.constant 4 : index
    %280 = memref.load %arg4[%c2_136, %c4_137] : memref<4x8xf32, #tpu.memory_space<smem>>
    %281 = vector.broadcast %280 : f32 to vector<16x16xf32>
    %282 = arith.mulf %263, %281 : vector<16x16xf32>
    %283 = arith.addf %169, %282 : vector<16x16xf32>
    %c2_138 = arith.constant 2 : index
    %c5_139 = arith.constant 5 : index
    %284 = memref.load %arg4[%c2_138, %c5_139] : memref<4x8xf32, #tpu.memory_space<smem>>
    %285 = vector.broadcast %284 : f32 to vector<16x16xf32>
    %286 = arith.mulf %263, %285 : vector<16x16xf32>
    %287 = arith.addf %173, %286 : vector<16x16xf32>
    %c2_140 = arith.constant 2 : index
    %c6_141 = arith.constant 6 : index
    %288 = memref.load %arg4[%c2_140, %c6_141] : memref<4x8xf32, #tpu.memory_space<smem>>
    %289 = vector.broadcast %288 : f32 to vector<16x16xf32>
    %290 = arith.mulf %263, %289 : vector<16x16xf32>
    %291 = arith.addf %177, %290 : vector<16x16xf32>
    %c2_142 = arith.constant 2 : index
    %c7_143 = arith.constant 7 : index
    %292 = memref.load %arg4[%c2_142, %c7_143] : memref<4x8xf32, #tpu.memory_space<smem>>
    %293 = vector.broadcast %292 : f32 to vector<16x16xf32>
    %294 = arith.mulf %263, %293 : vector<16x16xf32>
    %295 = arith.addf %181, %294 : vector<16x16xf32>
    %c2_144 = arith.constant 2 : index
    %c0_145 = arith.constant 0 : index
    %296 = memref.load %arg6[%c2_144, %c0_145] : memref<4x8xf32, #tpu.memory_space<smem>>
    %297 = vector.broadcast %296 : f32 to vector<16x16xf32>
    %298 = arith.mulf %215, %297 : vector<16x16xf32>
    %299 = arith.addf %185, %298 : vector<16x16xf32>
    %c2_146 = arith.constant 2 : index
    %c1_147 = arith.constant 1 : index
    %300 = memref.load %arg6[%c2_146, %c1_147] : memref<4x8xf32, #tpu.memory_space<smem>>
    %301 = vector.broadcast %300 : f32 to vector<16x16xf32>
    %302 = arith.mulf %215, %301 : vector<16x16xf32>
    %303 = arith.addf %189, %302 : vector<16x16xf32>
    %c2_148 = arith.constant 2 : index
    %c2_149 = arith.constant 2 : index
    %304 = memref.load %arg6[%c2_148, %c2_149] : memref<4x8xf32, #tpu.memory_space<smem>>
    %305 = vector.broadcast %304 : f32 to vector<16x16xf32>
    %306 = arith.mulf %215, %305 : vector<16x16xf32>
    %307 = arith.addf %193, %306 : vector<16x16xf32>
    %c2_150 = arith.constant 2 : index
    %c3_151 = arith.constant 3 : index
    %308 = memref.load %arg6[%c2_150, %c3_151] : memref<4x8xf32, #tpu.memory_space<smem>>
    %309 = vector.broadcast %308 : f32 to vector<16x16xf32>
    %310 = arith.mulf %215, %309 : vector<16x16xf32>
    %311 = arith.addf %197, %310 : vector<16x16xf32>
    %c2_152 = arith.constant 2 : index
    %c4_153 = arith.constant 4 : index
    %312 = memref.load %arg6[%c2_152, %c4_153] : memref<4x8xf32, #tpu.memory_space<smem>>
    %313 = vector.broadcast %312 : f32 to vector<16x16xf32>
    %314 = arith.mulf %215, %313 : vector<16x16xf32>
    %315 = arith.addf %201, %314 : vector<16x16xf32>
    %c2_154 = arith.constant 2 : index
    %c5_155 = arith.constant 5 : index
    %316 = memref.load %arg6[%c2_154, %c5_155] : memref<4x8xf32, #tpu.memory_space<smem>>
    %317 = vector.broadcast %316 : f32 to vector<16x16xf32>
    %318 = arith.mulf %215, %317 : vector<16x16xf32>
    %319 = arith.addf %205, %318 : vector<16x16xf32>
    %c2_156 = arith.constant 2 : index
    %c6_157 = arith.constant 6 : index
    %320 = memref.load %arg6[%c2_156, %c6_157] : memref<4x8xf32, #tpu.memory_space<smem>>
    %321 = vector.broadcast %320 : f32 to vector<16x16xf32>
    %322 = arith.mulf %215, %321 : vector<16x16xf32>
    %323 = arith.addf %209, %322 : vector<16x16xf32>
    %c2_158 = arith.constant 2 : index
    %c7_159 = arith.constant 7 : index
    %324 = memref.load %arg6[%c2_158, %c7_159] : memref<4x8xf32, #tpu.memory_space<smem>>
    %325 = vector.broadcast %324 : f32 to vector<16x16xf32>
    %326 = arith.mulf %215, %325 : vector<16x16xf32>
    %327 = arith.addf %213, %326 : vector<16x16xf32>
    %c0_160 = arith.constant 0 : index
    %c3_161 = arith.constant 3 : index
    %c0_162 = arith.constant 0 : index
    %c0_163 = arith.constant 0 : index
    %328 = vector.load %arg1[%c0_160, %c3_161, %c0_162, %c0_163] : memref<1x4x16x16xf32, #tpu.memory_space<vmem>>, vector<1x1x16x16xf32>
    %329 = vector.shape_cast %328 : vector<1x1x16x16xf32> to vector<16x16xf32>
    %330 = vector.extract_strided_slice %329 {offsets = [0, 0], sizes = [16, 15], strides = [1, 1]} : vector<16x16xf32> to vector<16x15xf32>
    %331 = tpu.concatenate %1, %330 in 1 : vector<16x1xf32>, vector<16x15xf32> -> vector<16x16xf32>
    %332 = vector.extract_strided_slice %329 {offsets = [0, 1], sizes = [16, 15], strides = [1, 1]} : vector<16x16xf32> to vector<16x15xf32>
    %333 = tpu.concatenate %332, %1 in 1 : vector<16x15xf32>, vector<16x1xf32> -> vector<16x16xf32>
    %c3_164 = arith.constant 3 : index
    %c0_165 = arith.constant 0 : index
    %334 = memref.load %arg2[%c3_164, %c0_165] : memref<4x9xf32, #tpu.memory_space<smem>>
    %335 = vector.broadcast %334 : f32 to vector<16x16xf32>
    %336 = arith.mulf %335, %331 : vector<16x16xf32>
    %c3_166 = arith.constant 3 : index
    %c1_167 = arith.constant 1 : index
    %337 = memref.load %arg2[%c3_166, %c1_167] : memref<4x9xf32, #tpu.memory_space<smem>>
    %338 = vector.broadcast %337 : f32 to vector<16x16xf32>
    %339 = arith.mulf %338, %329 : vector<16x16xf32>
    %340 = arith.addf %336, %339 : vector<16x16xf32>
    %c3_168 = arith.constant 3 : index
    %c2_169 = arith.constant 2 : index
    %341 = memref.load %arg2[%c3_168, %c2_169] : memref<4x9xf32, #tpu.memory_space<smem>>
    %342 = vector.broadcast %341 : f32 to vector<16x16xf32>
    %343 = arith.mulf %342, %333 : vector<16x16xf32>
    %344 = arith.addf %340, %343 : vector<16x16xf32>
    %c3_170 = arith.constant 3 : index
    %c3_171 = arith.constant 3 : index
    %345 = memref.load %arg2[%c3_170, %c3_171] : memref<4x9xf32, #tpu.memory_space<smem>>
    %346 = vector.broadcast %345 : f32 to vector<16x16xf32>
    %347 = arith.mulf %346, %331 : vector<16x16xf32>
    %c3_172 = arith.constant 3 : index
    %c4_173 = arith.constant 4 : index
    %348 = memref.load %arg2[%c3_172, %c4_173] : memref<4x9xf32, #tpu.memory_space<smem>>
    %349 = vector.broadcast %348 : f32 to vector<16x16xf32>
    %350 = arith.mulf %349, %329 : vector<16x16xf32>
    %351 = arith.addf %347, %350 : vector<16x16xf32>
    %c3_174 = arith.constant 3 : index
    %c5_175 = arith.constant 5 : index
    %352 = memref.load %arg2[%c3_174, %c5_175] : memref<4x9xf32, #tpu.memory_space<smem>>
    %353 = vector.broadcast %352 : f32 to vector<16x16xf32>
    %354 = arith.mulf %353, %333 : vector<16x16xf32>
    %355 = arith.addf %351, %354 : vector<16x16xf32>
    %c3_176 = arith.constant 3 : index
    %c6_177 = arith.constant 6 : index
    %356 = memref.load %arg2[%c3_176, %c6_177] : memref<4x9xf32, #tpu.memory_space<smem>>
    %357 = vector.broadcast %356 : f32 to vector<16x16xf32>
    %358 = arith.mulf %357, %331 : vector<16x16xf32>
    %c3_178 = arith.constant 3 : index
    %c7_179 = arith.constant 7 : index
    %359 = memref.load %arg2[%c3_178, %c7_179] : memref<4x9xf32, #tpu.memory_space<smem>>
    %360 = vector.broadcast %359 : f32 to vector<16x16xf32>
    %361 = arith.mulf %360, %329 : vector<16x16xf32>
    %362 = arith.addf %358, %361 : vector<16x16xf32>
    %c3_180 = arith.constant 3 : index
    %c8_181 = arith.constant 8 : index
    %363 = memref.load %arg2[%c3_180, %c8_181] : memref<4x9xf32, #tpu.memory_space<smem>>
    %364 = vector.broadcast %363 : f32 to vector<16x16xf32>
    %365 = arith.mulf %364, %333 : vector<16x16xf32>
    %366 = arith.addf %362, %365 : vector<16x16xf32>
    %367 = vector.extract_strided_slice %344 {offsets = [0, 0], sizes = [15, 16], strides = [1, 1]} : vector<16x16xf32> to vector<15x16xf32>
    %368 = tpu.concatenate %0, %367 in 0 : vector<1x16xf32>, vector<15x16xf32> -> vector<16x16xf32>
    %369 = arith.addf %355, %368 : vector<16x16xf32>
    %370 = vector.extract_strided_slice %366 {offsets = [1, 0], sizes = [15, 16], strides = [1, 1]} : vector<16x16xf32> to vector<15x16xf32>
    %371 = tpu.concatenate %370, %0 in 0 : vector<15x16xf32>, vector<1x16xf32> -> vector<16x16xf32>
    %372 = arith.addf %369, %371 : vector<16x16xf32>
    %c3_182 = arith.constant 3 : index
    %373 = memref.load %arg3[%c3_182] : memref<4xf32, #tpu.memory_space<smem>>
    %374 = vector.broadcast %373 : f32 to vector<16x16xf32>
    %375 = arith.addf %372, %374 : vector<16x16xf32>
    %cst_183 = arith.constant 0.000000e+00 : f32
    %376 = vector.broadcast %cst_183 : f32 to vector<16x16xf32>
    %377 = arith.maximumf %375, %376 : vector<16x16xf32>
    %c3_184 = arith.constant 3 : index
    %c0_185 = arith.constant 0 : index
    %378 = memref.load %arg4[%c3_184, %c0_185] : memref<4x8xf32, #tpu.memory_space<smem>>
    %379 = vector.broadcast %378 : f32 to vector<16x16xf32>
    %380 = arith.mulf %377, %379 : vector<16x16xf32>
    %381 = arith.addf %267, %380 : vector<16x16xf32>
    %c3_186 = arith.constant 3 : index
    %c1_187 = arith.constant 1 : index
    %382 = memref.load %arg4[%c3_186, %c1_187] : memref<4x8xf32, #tpu.memory_space<smem>>
    %383 = vector.broadcast %382 : f32 to vector<16x16xf32>
    %384 = arith.mulf %377, %383 : vector<16x16xf32>
    %385 = arith.addf %271, %384 : vector<16x16xf32>
    %c3_188 = arith.constant 3 : index
    %c2_189 = arith.constant 2 : index
    %386 = memref.load %arg4[%c3_188, %c2_189] : memref<4x8xf32, #tpu.memory_space<smem>>
    %387 = vector.broadcast %386 : f32 to vector<16x16xf32>
    %388 = arith.mulf %377, %387 : vector<16x16xf32>
    %389 = arith.addf %275, %388 : vector<16x16xf32>
    %c3_190 = arith.constant 3 : index
    %c3_191 = arith.constant 3 : index
    %390 = memref.load %arg4[%c3_190, %c3_191] : memref<4x8xf32, #tpu.memory_space<smem>>
    %391 = vector.broadcast %390 : f32 to vector<16x16xf32>
    %392 = arith.mulf %377, %391 : vector<16x16xf32>
    %393 = arith.addf %279, %392 : vector<16x16xf32>
    %c3_192 = arith.constant 3 : index
    %c4_193 = arith.constant 4 : index
    %394 = memref.load %arg4[%c3_192, %c4_193] : memref<4x8xf32, #tpu.memory_space<smem>>
    %395 = vector.broadcast %394 : f32 to vector<16x16xf32>
    %396 = arith.mulf %377, %395 : vector<16x16xf32>
    %397 = arith.addf %283, %396 : vector<16x16xf32>
    %c3_194 = arith.constant 3 : index
    %c5_195 = arith.constant 5 : index
    %398 = memref.load %arg4[%c3_194, %c5_195] : memref<4x8xf32, #tpu.memory_space<smem>>
    %399 = vector.broadcast %398 : f32 to vector<16x16xf32>
    %400 = arith.mulf %377, %399 : vector<16x16xf32>
    %401 = arith.addf %287, %400 : vector<16x16xf32>
    %c3_196 = arith.constant 3 : index
    %c6_197 = arith.constant 6 : index
    %402 = memref.load %arg4[%c3_196, %c6_197] : memref<4x8xf32, #tpu.memory_space<smem>>
    %403 = vector.broadcast %402 : f32 to vector<16x16xf32>
    %404 = arith.mulf %377, %403 : vector<16x16xf32>
    %405 = arith.addf %291, %404 : vector<16x16xf32>
    %c3_198 = arith.constant 3 : index
    %c7_199 = arith.constant 7 : index
    %406 = memref.load %arg4[%c3_198, %c7_199] : memref<4x8xf32, #tpu.memory_space<smem>>
    %407 = vector.broadcast %406 : f32 to vector<16x16xf32>
    %408 = arith.mulf %377, %407 : vector<16x16xf32>
    %409 = arith.addf %295, %408 : vector<16x16xf32>
    %c3_200 = arith.constant 3 : index
    %c0_201 = arith.constant 0 : index
    %410 = memref.load %arg6[%c3_200, %c0_201] : memref<4x8xf32, #tpu.memory_space<smem>>
    %411 = vector.broadcast %410 : f32 to vector<16x16xf32>
    %412 = arith.mulf %329, %411 : vector<16x16xf32>
    %413 = arith.addf %299, %412 : vector<16x16xf32>
    %c3_202 = arith.constant 3 : index
    %c1_203 = arith.constant 1 : index
    %414 = memref.load %arg6[%c3_202, %c1_203] : memref<4x8xf32, #tpu.memory_space<smem>>
    %415 = vector.broadcast %414 : f32 to vector<16x16xf32>
    %416 = arith.mulf %329, %415 : vector<16x16xf32>
    %417 = arith.addf %303, %416 : vector<16x16xf32>
    %c3_204 = arith.constant 3 : index
    %c2_205 = arith.constant 2 : index
    %418 = memref.load %arg6[%c3_204, %c2_205] : memref<4x8xf32, #tpu.memory_space<smem>>
    %419 = vector.broadcast %418 : f32 to vector<16x16xf32>
    %420 = arith.mulf %329, %419 : vector<16x16xf32>
    %421 = arith.addf %307, %420 : vector<16x16xf32>
    %c3_206 = arith.constant 3 : index
    %c3_207 = arith.constant 3 : index
    %422 = memref.load %arg6[%c3_206, %c3_207] : memref<4x8xf32, #tpu.memory_space<smem>>
    %423 = vector.broadcast %422 : f32 to vector<16x16xf32>
    %424 = arith.mulf %329, %423 : vector<16x16xf32>
    %425 = arith.addf %311, %424 : vector<16x16xf32>
    %c3_208 = arith.constant 3 : index
    %c4_209 = arith.constant 4 : index
    %426 = memref.load %arg6[%c3_208, %c4_209] : memref<4x8xf32, #tpu.memory_space<smem>>
    %427 = vector.broadcast %426 : f32 to vector<16x16xf32>
    %428 = arith.mulf %329, %427 : vector<16x16xf32>
    %429 = arith.addf %315, %428 : vector<16x16xf32>
    %c3_210 = arith.constant 3 : index
    %c5_211 = arith.constant 5 : index
    %430 = memref.load %arg6[%c3_210, %c5_211] : memref<4x8xf32, #tpu.memory_space<smem>>
    %431 = vector.broadcast %430 : f32 to vector<16x16xf32>
    %432 = arith.mulf %329, %431 : vector<16x16xf32>
    %433 = arith.addf %319, %432 : vector<16x16xf32>
    %c3_212 = arith.constant 3 : index
    %c6_213 = arith.constant 6 : index
    %434 = memref.load %arg6[%c3_212, %c6_213] : memref<4x8xf32, #tpu.memory_space<smem>>
    %435 = vector.broadcast %434 : f32 to vector<16x16xf32>
    %436 = arith.mulf %329, %435 : vector<16x16xf32>
    %437 = arith.addf %323, %436 : vector<16x16xf32>
    %c3_214 = arith.constant 3 : index
    %c7_215 = arith.constant 7 : index
    %438 = memref.load %arg6[%c3_214, %c7_215] : memref<4x8xf32, #tpu.memory_space<smem>>
    %439 = vector.broadcast %438 : f32 to vector<16x16xf32>
    %440 = arith.mulf %329, %439 : vector<16x16xf32>
    %441 = arith.addf %327, %440 : vector<16x16xf32>
    %c0_216 = arith.constant 0 : index
    %442 = memref.load %arg5[%c0_216] : memref<8xf32, #tpu.memory_space<smem>>
    %443 = vector.broadcast %442 : f32 to vector<16x16xf32>
    %444 = arith.addf %381, %443 : vector<16x16xf32>
    %445 = arith.addf %444, %413 : vector<16x16xf32>
    %cst_217 = arith.constant 0.000000e+00 : f32
    %446 = vector.broadcast %cst_217 : f32 to vector<16x16xf32>
    %447 = arith.maximumf %445, %446 : vector<16x16xf32>
    %c0_218 = arith.constant 0 : index
    %c0_219 = arith.constant 0 : index
    %c0_220 = arith.constant 0 : index
    %c0_221 = arith.constant 0 : index
    %448 = vector.load %arg7[%c0_218, %c0_219, %c0_220, %c0_221] : memref<1x8x16x16xf32, #tpu.memory_space<vmem>>, vector<1x1x16x16xf32>
    %449 = vector.shape_cast %448 : vector<1x1x16x16xf32> to vector<16x16xf32>
    %450 = vector.shape_cast %447 : vector<16x16xf32> to vector<1x1x16x16xf32>
    tpu.vector_store %arg7[%c0_218, %c0_219, %c0_220, %c0_221], %450 {strides = array<i32>} : memref<1x8x16x16xf32, #tpu.memory_space<vmem>>, vector<1x1x16x16xf32>,
    %c1_222 = arith.constant 1 : index
    %451 = memref.load %arg5[%c1_222] : memref<8xf32, #tpu.memory_space<smem>>
    %452 = vector.broadcast %451 : f32 to vector<16x16xf32>
    %453 = arith.addf %385, %452 : vector<16x16xf32>
    %454 = arith.addf %453, %417 : vector<16x16xf32>
    %cst_223 = arith.constant 0.000000e+00 : f32
    %455 = vector.broadcast %cst_223 : f32 to vector<16x16xf32>
    %456 = arith.maximumf %454, %455 : vector<16x16xf32>
    %c0_224 = arith.constant 0 : index
    %c1_225 = arith.constant 1 : index
    %c0_226 = arith.constant 0 : index
    %c0_227 = arith.constant 0 : index
    %457 = vector.load %arg7[%c0_224, %c1_225, %c0_226, %c0_227] : memref<1x8x16x16xf32, #tpu.memory_space<vmem>>, vector<1x1x16x16xf32>
    %458 = vector.shape_cast %457 : vector<1x1x16x16xf32> to vector<16x16xf32>
    %459 = vector.shape_cast %456 : vector<16x16xf32> to vector<1x1x16x16xf32>
    tpu.vector_store %arg7[%c0_224, %c1_225, %c0_226, %c0_227], %459 {strides = array<i32>} : memref<1x8x16x16xf32, #tpu.memory_space<vmem>>, vector<1x1x16x16xf32>,
    %c2_228 = arith.constant 2 : index
    %460 = memref.load %arg5[%c2_228] : memref<8xf32, #tpu.memory_space<smem>>
    %461 = vector.broadcast %460 : f32 to vector<16x16xf32>
    %462 = arith.addf %389, %461 : vector<16x16xf32>
    %463 = arith.addf %462, %421 : vector<16x16xf32>
    %cst_229 = arith.constant 0.000000e+00 : f32
    %464 = vector.broadcast %cst_229 : f32 to vector<16x16xf32>
    %465 = arith.maximumf %463, %464 : vector<16x16xf32>
    %c0_230 = arith.constant 0 : index
    %c2_231 = arith.constant 2 : index
    %c0_232 = arith.constant 0 : index
    %c0_233 = arith.constant 0 : index
    %466 = vector.load %arg7[%c0_230, %c2_231, %c0_232, %c0_233] : memref<1x8x16x16xf32, #tpu.memory_space<vmem>>, vector<1x1x16x16xf32>
    %467 = vector.shape_cast %466 : vector<1x1x16x16xf32> to vector<16x16xf32>
    %468 = vector.shape_cast %465 : vector<16x16xf32> to vector<1x1x16x16xf32>
    tpu.vector_store %arg7[%c0_230, %c2_231, %c0_232, %c0_233], %468 {strides = array<i32>} : memref<1x8x16x16xf32, #tpu.memory_space<vmem>>, vector<1x1x16x16xf32>,
    %c3_234 = arith.constant 3 : index
    %469 = memref.load %arg5[%c3_234] : memref<8xf32, #tpu.memory_space<smem>>
    %470 = vector.broadcast %469 : f32 to vector<16x16xf32>
    %471 = arith.addf %393, %470 : vector<16x16xf32>
    %472 = arith.addf %471, %425 : vector<16x16xf32>
    %cst_235 = arith.constant 0.000000e+00 : f32
    %473 = vector.broadcast %cst_235 : f32 to vector<16x16xf32>
    %474 = arith.maximumf %472, %473 : vector<16x16xf32>
    %c0_236 = arith.constant 0 : index
    %c3_237 = arith.constant 3 : index
    %c0_238 = arith.constant 0 : index
    %c0_239 = arith.constant 0 : index
    %475 = vector.load %arg7[%c0_236, %c3_237, %c0_238, %c0_239] : memref<1x8x16x16xf32, #tpu.memory_space<vmem>>, vector<1x1x16x16xf32>
    %476 = vector.shape_cast %475 : vector<1x1x16x16xf32> to vector<16x16xf32>
    %477 = vector.shape_cast %474 : vector<16x16xf32> to vector<1x1x16x16xf32>
    tpu.vector_store %arg7[%c0_236, %c3_237, %c0_238, %c0_239], %477 {strides = array<i32>} : memref<1x8x16x16xf32, #tpu.memory_space<vmem>>, vector<1x1x16x16xf32>,
    %c4_240 = arith.constant 4 : index
    %478 = memref.load %arg5[%c4_240] : memref<8xf32, #tpu.memory_space<smem>>
    %479 = vector.broadcast %478 : f32 to vector<16x16xf32>
    %480 = arith.addf %397, %479 : vector<16x16xf32>
    %481 = arith.addf %480, %429 : vector<16x16xf32>
    %cst_241 = arith.constant 0.000000e+00 : f32
    %482 = vector.broadcast %cst_241 : f32 to vector<16x16xf32>
    %483 = arith.maximumf %481, %482 : vector<16x16xf32>
    %c0_242 = arith.constant 0 : index
    %c4_243 = arith.constant 4 : index
    %c0_244 = arith.constant 0 : index
    %c0_245 = arith.constant 0 : index
    %484 = vector.load %arg7[%c0_242, %c4_243, %c0_244, %c0_245] : memref<1x8x16x16xf32, #tpu.memory_space<vmem>>, vector<1x1x16x16xf32>
    %485 = vector.shape_cast %484 : vector<1x1x16x16xf32> to vector<16x16xf32>
    %486 = vector.shape_cast %483 : vector<16x16xf32> to vector<1x1x16x16xf32>
    tpu.vector_store %arg7[%c0_242, %c4_243, %c0_244, %c0_245], %486 {strides = array<i32>} : memref<1x8x16x16xf32, #tpu.memory_space<vmem>>, vector<1x1x16x16xf32>,
    %c5_246 = arith.constant 5 : index
    %487 = memref.load %arg5[%c5_246] : memref<8xf32, #tpu.memory_space<smem>>
    %488 = vector.broadcast %487 : f32 to vector<16x16xf32>
    %489 = arith.addf %401, %488 : vector<16x16xf32>
    %490 = arith.addf %489, %433 : vector<16x16xf32>
    %cst_247 = arith.constant 0.000000e+00 : f32
    %491 = vector.broadcast %cst_247 : f32 to vector<16x16xf32>
    %492 = arith.maximumf %490, %491 : vector<16x16xf32>
    %c0_248 = arith.constant 0 : index
    %c5_249 = arith.constant 5 : index
    %c0_250 = arith.constant 0 : index
    %c0_251 = arith.constant 0 : index
    %493 = vector.load %arg7[%c0_248, %c5_249, %c0_250, %c0_251] : memref<1x8x16x16xf32, #tpu.memory_space<vmem>>, vector<1x1x16x16xf32>
    %494 = vector.shape_cast %493 : vector<1x1x16x16xf32> to vector<16x16xf32>
    %495 = vector.shape_cast %492 : vector<16x16xf32> to vector<1x1x16x16xf32>
    tpu.vector_store %arg7[%c0_248, %c5_249, %c0_250, %c0_251], %495 {strides = array<i32>} : memref<1x8x16x16xf32, #tpu.memory_space<vmem>>, vector<1x1x16x16xf32>,
    %c6_252 = arith.constant 6 : index
    %496 = memref.load %arg5[%c6_252] : memref<8xf32, #tpu.memory_space<smem>>
    %497 = vector.broadcast %496 : f32 to vector<16x16xf32>
    %498 = arith.addf %405, %497 : vector<16x16xf32>
    %499 = arith.addf %498, %437 : vector<16x16xf32>
    %cst_253 = arith.constant 0.000000e+00 : f32
    %500 = vector.broadcast %cst_253 : f32 to vector<16x16xf32>
    %501 = arith.maximumf %499, %500 : vector<16x16xf32>
    %c0_254 = arith.constant 0 : index
    %c6_255 = arith.constant 6 : index
    %c0_256 = arith.constant 0 : index
    %c0_257 = arith.constant 0 : index
    %502 = vector.load %arg7[%c0_254, %c6_255, %c0_256, %c0_257] : memref<1x8x16x16xf32, #tpu.memory_space<vmem>>, vector<1x1x16x16xf32>
    %503 = vector.shape_cast %502 : vector<1x1x16x16xf32> to vector<16x16xf32>
    %504 = vector.shape_cast %501 : vector<16x16xf32> to vector<1x1x16x16xf32>
    tpu.vector_store %arg7[%c0_254, %c6_255, %c0_256, %c0_257], %504 {strides = array<i32>} : memref<1x8x16x16xf32, #tpu.memory_space<vmem>>, vector<1x1x16x16xf32>,
    %c7_258 = arith.constant 7 : index
    %505 = memref.load %arg5[%c7_258] : memref<8xf32, #tpu.memory_space<smem>>
    %506 = vector.broadcast %505 : f32 to vector<16x16xf32>
    %507 = arith.addf %409, %506 : vector<16x16xf32>
    %508 = arith.addf %507, %441 : vector<16x16xf32>
    %cst_259 = arith.constant 0.000000e+00 : f32
    %509 = vector.broadcast %cst_259 : f32 to vector<16x16xf32>
    %510 = arith.maximumf %508, %509 : vector<16x16xf32>
    %c0_260 = arith.constant 0 : index
    %c7_261 = arith.constant 7 : index
    %c0_262 = arith.constant 0 : index
    %c0_263 = arith.constant 0 : index
    %511 = vector.load %arg7[%c0_260, %c7_261, %c0_262, %c0_263] : memref<1x8x16x16xf32, #tpu.memory_space<vmem>>, vector<1x1x16x16xf32>
    %512 = vector.shape_cast %511 : vector<1x1x16x16xf32> to vector<16x16xf32>
    %513 = vector.shape_cast %510 : vector<16x16xf32> to vector<1x1x16x16xf32>
    tpu.vector_store %arg7[%c0_260, %c7_261, %c0_262, %c0_263], %513 {strides = array<i32>} : memref<1x8x16x16xf32, #tpu.memory_space<vmem>>, vector<1x1x16x16xf32>,
    return
  }
  func.func @transform_0(%arg0: i32) -> (i32, i32, i32, i32) {
    %c0_i32 = arith.constant 0 : i32
    %c0_i32_0 = arith.constant 0 : i32
    %c0_i32_1 = arith.constant 0 : i32
    %c0_i32_2 = arith.constant 0 : i32
    return %arg0, %c0_i32, %c0_i32_0, %c0_i32_1 : i32, i32, i32, i32
  }
  func.func @transform_1(%arg0: i32) -> (i32, i32) {
    %c0_i32 = arith.constant 0 : i32
    %c0_i32_0 = arith.constant 0 : i32
    %c0_i32_1 = arith.constant 0 : i32
    return %c0_i32, %c0_i32_0 : i32, i32
  }
  func.func @transform_2(%arg0: i32) -> i32 {
    %c0_i32 = arith.constant 0 : i32
    %c0_i32_0 = arith.constant 0 : i32
    return %c0_i32 : i32
  }
  func.func @transform_3(%arg0: i32) -> (i32, i32) {
    %c0_i32 = arith.constant 0 : i32
    %c0_i32_0 = arith.constant 0 : i32
    %c0_i32_1 = arith.constant 0 : i32
    return %c0_i32, %c0_i32_0 : i32, i32
  }
  func.func @transform_4(%arg0: i32) -> i32 {
    %c0_i32 = arith.constant 0 : i32
    %c0_i32_0 = arith.constant 0 : i32
    return %c0_i32 : i32
  }
  func.func @transform_5(%arg0: i32) -> (i32, i32) {
    %c0_i32 = arith.constant 0 : i32
    %c0_i32_0 = arith.constant 0 : i32
    %c0_i32_1 = arith.constant 0 : i32
    return %c0_i32, %c0_i32_0 : i32, i32
  }
  func.func @transform_6(%arg0: i32) -> (i32, i32, i32, i32) {
    %c0_i32 = arith.constant 0 : i32
    %c0_i32_0 = arith.constant 0 : i32
    %c0_i32_1 = arith.constant 0 : i32
    %c0_i32_2 = arith.constant 0 : i32
    return %arg0, %c0_i32, %c0_i32_0, %c0_i32_1 : i32, i32, i32, i32
  }
}

</mosaic_0001>

<llo_original>
// kernel: tpu_custom_call.1
$region0: #{tpu_custom_call.1}
  #allocation0 [shape = 'u32[]', space=smem, size = 0x4, offset = 0x4, fixed_abs, tag = 'smem constant byte address 0x4 - core index']
  #allocation1 [shape = 'u32[144,128]{1,0:T(1,128)}', space=vmem, size = 0x12000, scoped, tag = 'internal scratch']
  %s0 = inlined_call_operand.hbm [shape: f32[2,4,16,16], index: 0, kind: input, shape index: {}]
  %s1 = inlined_call_operand.hbm [shape: f32[4,9], index: 1, kind: input, shape index: {}]
  %s2 = inlined_call_operand.vmem [shape: f32[4], index: 2, kind: input, shape index: {}]
  %s3 = inlined_call_operand.vmem [shape: f32[4,8], index: 3, kind: input, shape index: {}]
  %s4 = inlined_call_operand.vmem [shape: f32[8], index: 4, kind: input, shape index: {}]
  %s5 = inlined_call_operand.vmem [shape: f32[4,8], index: 5, kind: input, shape index: {}]
  %s6 = inlined_call_operand.hbm [shape: f32[2,8,16,16], index: 6, kind: output, shape index: {}]
  %s7 = sld [smem:[#allocation0]]
  $region81: #{tpu_custom_call.1} parent=0
    _
  %s9 = ssub.s32 1, %s7
  %s10 = scalar_select 0, %s9, %s7
  $region1: #{tpu_custom_call.1} parent=0
    #allocation2 [shape = 'u8[65536]{0}', space=vmem, size = 0x10000, scoped, tag = 'input window, operand 0']
    #allocation3 [shape = 's32[2]{0}', space=sflag, size = 0x8, scoped, tag = 'scoped memory for tpu_custom_call.1']
    #allocation4 [shape = 's32[2]{0}', space=sflag, size = 0x8, scoped, tag = 'scoped memory for tpu_custom_call.1']
    #allocation5 [shape = 's32[2]{0}', space=sflag, size = 0x8, scoped, tag = 'scoped memory for tpu_custom_call.1']
    #allocation6 [shape = 's32[2]{0}', space=sflag, size = 0x8, scoped, tag = 'scoped memory for tpu_custom_call.1']
    #allocation7 [shape = 'u8[2048]{0}', space=smem, size = 0x800, scoped, tag = 'input window, operand 1, single buffered']
    #allocation8 [shape = 'u8[512]{0}', space=smem, size = 0x200, scoped, tag = 'input window, operand 2, single buffered']
    #allocation9 [shape = 'u8[2048]{0}', space=smem, size = 0x800, scoped, tag = 'input window, operand 3, single buffered']
    #allocation10 [shape = 's32[1]{0}', space=sflag, size = 0x4, scoped, tag = 'scoped memory for tpu_custom_call.1']
    #allocation11 [shape = 'u8[512]{0}', space=smem, size = 0x200, scoped, tag = 'input window, operand 4, single buffered']
    #allocation12 [shape = 'u8[2048]{0}', space=smem, size = 0x800, scoped, tag = 'input window, operand 5, single buffered']
    #allocation13 [shape = 's32[1]{0}', space=sflag, size = 0x4, scoped, tag = 'scoped memory for tpu_custom_call.1']
    #allocation14 [shape = 'u8[131072]{0}', space=vmem, size = 0x20000, scoped, tag = 'output window, operand 0']
    %11 = vsyncpa [#allocation3], 0
    %s12 = scalar_lea.sflag [#allocation3], 1
    %13 = vsyncpa %s12, 0
    %14 = vsyncpa [#allocation5], 0
    %15 = vsyncpa [#allocation6], 0
    %16 = vsyncpa [#allocation10], 0
    %17 = vsyncpa [#allocation13], 0
    %18 = vsyncpa [#allocation4], 0
    %s19 = scalar_lea.sflag [#allocation4], 1
    %20 = vsyncpa %s19, 0
    loop: start=0, step=1, limit=4
    $region2: #{tpu_custom_call.1} parent=1 // loop_pre_header
      _
    $region3: #{tpu_custom_call.1} parent=1 // loop_header
      %s22 = sphi 0, %s26
      %p23 = scmp.ge.s32.totalorder %s22, 4
      %s32 = sphi 0, %s34
      %s35 = sphi 0, %s32
      %s36 = sphi 0, %s35
      %s52 = sphi 0, %s36
      %s56 = sphi 0, %s56
      %s58 = sphi 0, %s56
      %s59 = sphi 0, %s58
      %s73 = sphi 0, %s59
      %s77 = sphi 0, %s77
      %s79 = sphi 0, %s77
      %s80 = sphi 0, %s79
      %s94 = sphi 0, %s80
      %s98 = sphi 0, %s98
      %s100 = sphi 0, %s98
      %s101 = sphi 0, %s100
      %s115 = sphi 0, %s101
      %s119 = sphi 0, %s119
      %s121 = sphi 0, %s119
      %s122 = sphi 0, %s121
      %s136 = sphi 0, %s122
      %s140 = sphi 0, %s140
      %s142 = sphi 0, %s140
      %s143 = sphi 0, %s142
      %s157 = sphi 0, %s143
      %s163 = sphi 0, %s165
      %s166 = sphi 0, %s163
      %s167 = sphi 0, %s166
      %s183 = sphi 0, %s167
    $region4: #{tpu_custom_call.1} parent=1 // loop_header_branch
      %25 = sbr.rel (%p23) target = $region8
    $region5: #{tpu_custom_call.1} parent=1 // loop_body
      %s27 = ssub.s32 %s22, 1
      %s28 = ssub.s32 %s22, 2
      %s29 = sadd.s32 %s22, 1
      %s30 = ssub.s32 %s22, %s29
      %p31 = scmp.eq.s32.totalorder %s30, 0
      %s33 = sadd.s32 %s32, 1
      %s34 = scalar_select %p31, %s32, %s33
      %p37 = pneg %p31
      %p38 = scmp.eq.s32.totalorder %s22, 1
      %p39 = por %p37, %p38
      %p40 = scmp.ne.s32.totalorder %s32, %s35
      %p41 = scmp.eq.s32.totalorder %s22, 0
      %p42 = por %p40, %p41
      %p43 = scmp.ne.s32.totalorder %s32, %s35
      %p44 = scmp.eq.s32.totalorder %s27, 1
      %p45 = por %p43, %p44
      %p46 = scmp.ne.s32.totalorder %s35, %s36
      %p47 = scmp.eq.s32.totalorder %s27, 0
      %p48 = por %p46, %p47
      %p49 = scmp.ne.s32.totalorder %s35, %s36
      %p50 = scmp.eq.s32.totalorder %s28, 1
      %p51 = por %p49, %p50
      %p53 = scmp.ne.s32.totalorder %s36, %s52
      %p54 = scmp.eq.s32.totalorder %s28, 0
      %p55 = por %p53, %p54
      %s57 = sadd.s32 %s56, 1
      %p60 = scmp.eq.s32.totalorder %s22, 1
      %p61 = scmp.ne.s32.totalorder %s56, %s58
      %p62 = scmp.eq.s32.totalorder %s22, 0
      %p63 = por %p61, %p62
      %p64 = scmp.ne.s32.totalorder %s56, %s58
      %p65 = scmp.eq.s32.totalorder %s27, 1
      %p66 = por %p64, %p65
      %p67 = scmp.ne.s32.totalorder %s58, %s59
      %p68 = scmp.eq.s32.totalorder %s27, 0
      %p69 = por %p67, %p68
      %p70 = scmp.ne.s32.totalorder %s58, %s59
      %p71 = scmp.eq.s32.totalorder %s28, 1
      %p72 = por %p70, %p71
      %p74 = scmp.ne.s32.totalorder %s59, %s73
      %p75 = scmp.eq.s32.totalorder %s28, 0
      %p76 = por %p74, %p75
      %s78 = sadd.s32 %s77, 1
      %p81 = scmp.eq.s32.totalorder %s22, 1
      %p82 = scmp.ne.s32.totalorder %s77, %s79
      %p83 = scmp.eq.s32.totalorder %s22, 0
      %p84 = por %p82, %p83
      %p85 = scmp.ne.s32.totalorder %s77, %s79
      %p86 = scmp.eq.s32.totalorder %s27, 1
      %p87 = por %p85, %p86
      %p88 = scmp.ne.s32.totalorder %s79, %s80
      %p89 = scmp.eq.s32.totalorder %s27, 0
      %p90 = por %p88, %p89
      %p91 = scmp.ne.s32.totalorder %s79, %s80
      %p92 = scmp.eq.s32.totalorder %s28, 1
      %p93 = por %p91, %p92
      %p95 = scmp.ne.s32.totalorder %s80, %s94
      %p96 = scmp.eq.s32.totalorder %s28, 0
      %p97 = por %p95, %p96
      %s99 = sadd.s32 %s98, 1
      %p102 = scmp.eq.s32.totalorder %s22, 1
      %p103 = scmp.ne.s32.totalorder %s98, %s100
      %p104 = scmp.eq.s32.totalorder %s22, 0
      %p105 = por %p103, %p104
      %p106 = scmp.ne.s32.totalorder %s98, %s100
      %p107 = scmp.eq.s32.totalorder %s27, 1
      %p108 = por %p106, %p107
      %p109 = scmp.ne.s32.totalorder %s100, %s101
      %p110 = scmp.eq.s32.totalorder %s27, 0
      %p111 = por %p109, %p110
      %p112 = scmp.ne.s32.totalorder %s100, %s101
      %p113 = scmp.eq.s32.totalorder %s28, 1
      %p114 = por %p112, %p113
      %p116 = scmp.ne.s32.totalorder %s101, %s115
      %p117 = scmp.eq.s32.totalorder %s28, 0
      %p118 = por %p116, %p117
      %s120 = sadd.s32 %s119, 1
      %p123 = scmp.eq.s32.totalorder %s22, 1
      %p124 = scmp.ne.s32.totalorder %s119, %s121
      %p125 = scmp.eq.s32.totalorder %s22, 0
      %p126 = por %p124, %p125
      %p127 = scmp.ne.s32.totalorder %s119, %s121
      %p128 = scmp.eq.s32.totalorder %s27, 1
      %p129 = por %p127, %p128
      %p130 = scmp.ne.s32.totalorder %s121, %s122
      %p131 = scmp.eq.s32.totalorder %s27, 0
      %p132 = por %p130, %p131
      %p133 = scmp.ne.s32.totalorder %s121, %s122
      %p134 = scmp.eq.s32.totalorder %s28, 1
      %p135 = por %p133, %p134
      %p137 = scmp.ne.s32.totalorder %s122, %s136
      %p138 = scmp.eq.s32.totalorder %s28, 0
      %p139 = por %p137, %p138
      %s141 = sadd.s32 %s140, 1
      %p144 = scmp.eq.s32.totalorder %s22, 1
      %p145 = scmp.ne.s32.totalorder %s140, %s142
      %p146 = scmp.eq.s32.totalorder %s22, 0
      %p147 = por %p145, %p146
      %p148 = scmp.ne.s32.totalorder %s140, %s142
      %p149 = scmp.eq.s32.totalorder %s27, 1
      %p150 = por %p148, %p149
      %p151 = scmp.ne.s32.totalorder %s142, %s143
      %p152 = scmp.eq.s32.totalorder %s27, 0
      %p153 = por %p151, %p152
      %p154 = scmp.ne.s32.totalorder %s142, %s143
      %p155 = scmp.eq.s32.totalorder %s28, 1
      %p156 = por %p154, %p155
      %p158 = scmp.ne.s32.totalorder %s143, %s157
      %p159 = scmp.eq.s32.totalorder %s28, 0
      %p160 = por %p158, %p159
      %s161 = ssub.s32 %s22, %s29
      %p162 = scmp.eq.s32.totalorder %s161, 0
      %s164 = sadd.s32 %s163, 1
      %s165 = scalar_select %p162, %s163, %s164
      %p168 = pneg %p162
      %p169 = scmp.eq.s32.totalorder %s22, 1
      %p170 = por %p168, %p169
      %p171 = scmp.ne.s32.totalorder %s163, %s166
      %p172 = scmp.eq.s32.totalorder %s22, 0
      %p173 = por %p171, %p172
      %p174 = scmp.ne.s32.totalorder %s163, %s166
      %p175 = scmp.eq.s32.totalorder %s27, 1
      %p176 = por %p174, %p175
      %p177 = scmp.ne.s32.totalorder %s166, %s167
      %p178 = scmp.eq.s32.totalorder %s27, 0
      %p179 = por %p177, %p178
      %p180 = scmp.ne.s32.totalorder %s166, %s167
      %p181 = scmp.eq.s32.totalorder %s28, 1
      %p182 = por %p180, %p181
      %p184 = scmp.ne.s32.totalorder %s167, %s183
      %p185 = scmp.eq.s32.totalorder %s28, 0
      %p186 = por %p184, %p185
      %p187 = scmp.le.s32.totalorder 1, %s22
      %p188 = scmp.lt.s32.totalorder %s22, 3
      %p189 = pnand %p187, %p188
      %p190 = pneg %p189
      // Predicated region
      $region9: #{tpu_custom_call.1} parent=5 // pred_check
        _
      $region10: #{tpu_custom_call.1} parent=5 // pred_check_branch
        %192 = sbr.rel (%p189) target = $region12
      $region11: #{tpu_custom_call.1} parent=5 // pred_region
        %s193 = ssub.s32 %s22, 1
        // Predicated region
        $region13: #{tpu_custom_call.1} parent=11 // pred_check
          %p194 = pneg %p69
        $region14: #{tpu_custom_call.1} parent=11 // pred_check_branch
          %196 = sbr.rel (%p194) target = $region16
        $region15: #{tpu_custom_call.1} parent=11 // pred_region
          %s198 = ssub.s32 64, 64
          %199 = vsyncadd [#allocation5], %s198
          %202 = dma.hbm_to_smem %s1, 64, [#allocation7], [#allocation5]
        $region16: #{tpu_custom_call.1} parent=11 // pred_fallthru
          _
        // Predicated region
        $region17: #{tpu_custom_call.1} parent=11 // pred_check
          %p203 = pneg %p90
        $region18: #{tpu_custom_call.1} parent=11 // pred_check_branch
          %205 = sbr.rel (%p203) target = $region20
        $region19: #{tpu_custom_call.1} parent=11 // pred_region
          %s207 = ssub.s32 16, 16
          %208 = vsyncadd [#allocation6], %s207
          %s210 = sshll.u32 %s2, 4
          %s211 = int_to_ptr.vmem [resolvable:$true] %s210
          %213 = dma.vmem_to_smem %s211, 16, [#allocation8], [#allocation6]
        $region20: #{tpu_custom_call.1} parent=11 // pred_fallthru
          _
        // Predicated region
        $region21: #{tpu_custom_call.1} parent=11 // pred_check
          %p214 = pneg %p111
        $region22: #{tpu_custom_call.1} parent=11 // pred_check_branch
          %216 = sbr.rel (%p214) target = $region24
        $region23: #{tpu_custom_call.1} parent=11 // pred_region
          %s218 = ssub.s32 64, 64
          %219 = vsyncadd [#allocation10], %s218
          %s221 = sshll.u32 %s3, 4
          %s222 = int_to_ptr.vmem [resolvable:$true] %s221
          %224 = dma.vmem_to_smem %s222, 64, [#allocation9], [#allocation10]
        $region24: #{tpu_custom_call.1} parent=11 // pred_fallthru
          _
        // Predicated region
        $region25: #{tpu_custom_call.1} parent=11 // pred_check
          %p225 = pneg %p132
        $region26: #{tpu_custom_call.1} parent=11 // pred_check_branch
          %227 = sbr.rel (%p225) target = $region28
        $region27: #{tpu_custom_call.1} parent=11 // pred_region
          %s229 = ssub.s32 16, 16
          %230 = vsyncadd [#allocation10], %s229
          %s232 = sshll.u32 %s4, 4
          %s233 = int_to_ptr.vmem [resolvable:$true] %s232
          %235 = dma.vmem_to_smem %s233, 16, [#allocation11], [#allocation10]
        $region28: #{tpu_custom_call.1} parent=11 // pred_fallthru
          _
        // Predicated region
        $region29: #{tpu_custom_call.1} parent=11 // pred_check
          %p236 = pneg %p153
        $region30: #{tpu_custom_call.1} parent=11 // pred_check_branch
          %238 = sbr.rel (%p236) target = $region32
        $region31: #{tpu_custom_call.1} parent=11 // pred_region
          %s240 = ssub.s32 64, 64
          %241 = vsyncadd [#allocation13], %s240
          %s243 = sshll.u32 %s5, 4
          %s244 = int_to_ptr.vmem [resolvable:$true] %s243
          %246 = dma.vmem_to_smem %s244, 64, [#allocation12], [#allocation13]
        $region32: #{tpu_custom_call.1} parent=11 // pred_fallthru
          _
      $region12: #{tpu_custom_call.1} parent=5 // pred_fallthru
        _
      %p247 = scmp.lt.s32.totalorder %s22, 2
      // Predicated region
      $region33: #{tpu_custom_call.1} parent=5 // pred_check
        %p248 = pneg %p247
      $region34: #{tpu_custom_call.1} parent=5 // pred_check_branch
        %250 = sbr.rel (%p248) target = $region36
      $region35: #{tpu_custom_call.1} parent=5 // pred_region
        // Predicated region
        $region37: #{tpu_custom_call.1} parent=35 // pred_check
          %p251 = pneg %p42
        $region38: #{tpu_custom_call.1} parent=35 // pred_check_branch
          %253 = sbr.rel (%p251) target = $region40
        $region39: #{tpu_custom_call.1} parent=35 // pred_region
          %s254 = sand.u32 %s32, 1
          %s255 = scalar_lea.sflag [#allocation3], %s254
          %s256 = sand.u32 %s32, 1
          %s257 = smul.addr %s256, 64
          %s258 = scalar_lea.vmem [#allocation2], %s257
          %s260 = ssub.s32 1024, 1024
          %261 = vsyncadd %s255, %s260
          %s262 = smul.addr %s22, 8
          %s263 = smul.addr %s262, 128
          %s264 = scalar_lea.hbm %s0, %s263
          %s265 = sshll.u32 %s258, 4
          %s266 = int_to_ptr.vmem [resolvable:$true] %s265
          %271 = dma.hbm_to_vmem [thread:$0]  %s264, 1024, %s266, %s255, 128, 128, 8
        $region40: #{tpu_custom_call.1} parent=35 // pred_fallthru
          _
      $region36: #{tpu_custom_call.1} parent=5 // pred_fallthru
        _
      %p272 = scmp.le.s32.totalorder 1, %s22
      %p273 = scmp.lt.s32.totalorder %s22, 3
      %p274 = pnand %p272, %p273
      %p275 = pneg %p274
      // Predicated region
      $region41: #{tpu_custom_call.1} parent=5 // pred_check
        _
      $region42: #{tpu_custom_call.1} parent=5 // pred_check_branch
        %277 = sbr.rel (%p274) target = $region44
      $region43: #{tpu_custom_call.1} parent=5 // pred_region
        %s278 = ssub.s32 %s22, 1
        %s279 = sand.u32 %s35, 1
        %s280 = scalar_lea.sflag [#allocation3], %s279
        %s281 = sand.u32 %s35, 1
        %s282 = smul.addr %s281, 64
        %s283 = scalar_lea.vmem [#allocation2], %s282
        // Predicated region
        $region45: #{tpu_custom_call.1} parent=43 // pred_check
          %p284 = pneg %p48
        $region46: #{tpu_custom_call.1} parent=43 // pred_check_branch
          %286 = sbr.rel (%p284) target = $region48
        $region47: #{tpu_custom_call.1} parent=43 // pred_region
          %287 = dma.done %s280, 1024
        $region48: #{tpu_custom_call.1} parent=43 // pred_fallthru
          _
        // Predicated region
        $region49: #{tpu_custom_call.1} parent=43 // pred_check
          %p288 = pneg %p69
        $region50: #{tpu_custom_call.1} parent=43 // pred_check_branch
          %290 = sbr.rel (%p288) target = $region52
        $region51: #{tpu_custom_call.1} parent=43 // pred_region
          %291 = dma.done [#allocation5], 64
        $region52: #{tpu_custom_call.1} parent=43 // pred_fallthru
          _
        // Predicated region
        $region53: #{tpu_custom_call.1} parent=43 // pred_check
          %p292 = pneg %p90
        $region54: #{tpu_custom_call.1} parent=43 // pred_check_branch
          %294 = sbr.rel (%p292) target = $region56
        $region55: #{tpu_custom_call.1} parent=43 // pred_region
          %295 = dma.done [#allocation6], 16
        $region56: #{tpu_custom_call.1} parent=43 // pred_fallthru
          _
        // Predicated region
        $region57: #{tpu_custom_call.1} parent=43 // pred_check
          %p296 = pneg %p111
        $region58: #{tpu_custom_call.1} parent=43 // pred_check_branch
          %298 = sbr.rel (%p296) target = $region60
        $region59: #{tpu_custom_call.1} parent=43 // pred_region
          %299 = dma.done [#allocation10], 64
        $region60: #{tpu_custom_call.1} parent=43 // pred_fallthru
          _
        // Predicated region
        $region61: #{tpu_custom_call.1} parent=43 // pred_check
          %p300 = pneg %p132
        $region62: #{tpu_custom_call.1} parent=43 // pred_check_branch
          %302 = sbr.rel (%p300) target = $region64
        $region63: #{tpu_custom_call.1} parent=43 // pred_region
          %303 = dma.done [#allocation10], 16
        $region64: #{tpu_custom_call.1} parent=43 // pred_fallthru
          _
        // Predicated region
        $region65: #{tpu_custom_call.1} parent=43 // pred_check
          %p304 = pneg %p153
        $region66: #{tpu_custom_call.1} parent=43 // pred_check_branch
          %306 = sbr.rel (%p304) target = $region68
        $region67: #{tpu_custom_call.1} parent=43 // pred_region
          %307 = dma.done [#allocation13], 64
        $region68: #{tpu_custom_call.1} parent=43 // pred_fallthru
          _
        %308 = sfence
        %s309 = sand.u32 %s35, 1
        %s310 = scalar_lea.sflag [#allocation3], %s309
        %s311 = sand.u32 %s35, 1
        %s312 = smul.addr %s311, 64
        %s313 = scalar_lea.vmem [#allocation2], %s312
        %p314 = pneg %p48
        %p315 = pneg %p45
        %p316 = pneg %p69
        %p317 = pneg %p66
        %p318 = pneg %p90
        %p319 = pneg %p87
        %p320 = pneg %p111
        %p321 = pneg %p108
        %p322 = pneg %p132
        %p323 = pneg %p129
        %p324 = pneg %p153
        %p325 = pneg %p150
        %p326 = pneg %p179
        %p327 = pneg %p176
        %s328 = sand.u32 %s166, 1
        %s329 = scalar_lea.sflag [#allocation4], %s328
        %s330 = sand.u32 %s166, 1
        %s331 = smul.addr %s330, 128
        %s332 = scalar_lea.vmem [#allocation14], %s331
        %v333 = vld [vmem:[%s283] sm:$0xff]
        %v334 = vld [vmem:[%s283 + $0x8] sm:$0xff]
        %337 = vrot.lane.b32.xlu0 %v333, 1
        %v338 = vpop.permute.xlu0 %337
        %339 = vrot.lane.b32.xlu0 %v334, 1
        %v340 = vpop.permute.xlu0 %339
        %vm343 = vcmask 7168
        %v344 = vsel %vm343, 0.0, %v338
        %v345 = vsel %vm343, 0.0, %v340
        %346 = vrot.lane.b32.xlu0 %v333, 127
        %v347 = vpop.permute.xlu0 %346
        %348 = vrot.lane.b32.xlu0 %v334, 127
        %v349 = vpop.permute.xlu0 %348
        %vm352 = vcmask 121856
        %v353 = vsel %vm352, %v347, 0.0
        %v354 = vsel %vm352, %v349, 0.0
        %s355 = sld [smem:[#allocation7]]
        %v356 = vstv %s355
        %v357 = vmul.f32 %v356, %v344
        %v358 = vmul.f32 %v356, %v345
        %s359 = sld [smem:[#allocation7 + $0x1]]
        %v360 = vstv %s359
        %v361 = vmul.f32 %v360, %v333
        %v362 = vmul.f32 %v360, %v334
        %v363 = vadd.f32 %v357, %v361
        %v364 = vadd.f32 %v358, %v362
        %s365 = sld [smem:[#allocation7 + $0x2]]
        %v366 = vstv %s365
        %v367 = vmul.f32 %v366, %v353
        %v368 = vmul.f32 %v366, %v354
        %v369 = vadd.f32 %v363, %v367
        %v370 = vadd.f32 %v364, %v368
        %s371 = sld [smem:[#allocation7 + $0x3]]
        %v372 = vstv %s371
        %v373 = vmul.f32 %v372, %v344
        %v374 = vmul.f32 %v372, %v345
        %s375 = sld [smem:[#allocation7 + $0x4]]
        %v376 = vstv %s375
        %v377 = vmul.f32 %v376, %v333
        %v378 = vmul.f32 %v376, %v334
        %v379 = vadd.f32 %v373, %v377
        %v380 = vadd.f32 %v374, %v378
        %s381 = sld [smem:[#allocation7 + $0x5]]
        %v382 = vstv %s381
        %v383 = vmul.f32 %v382, %v353
        %v384 = vmul.f32 %v382, %v354
        %v385 = vadd.f32 %v379, %v383
        %v386 = vadd.f32 %v380, %v384
        %s387 = sld [smem:[#allocation7 + $0x6]]
        %v388 = vstv %s387
        %v389 = vmul.f32 %v388, %v344
        %v390 = vmul.f32 %v388, %v345
        %s391 = sld [smem:[#allocation7 + $0x7]]
        %v392 = vstv %s391
        %v393 = vmul.f32 %v392, %v333
        %v394 = vmul.f32 %v392, %v334
        %v395 = vadd.f32 %v389, %v393
        %v396 = vadd.f32 %v390, %v394
        %s397 = sld [smem:[#allocation7 + $0x8]]
        %v398 = vstv %s397
        %v399 = vmul.f32 %v398, %v353
        %v400 = vmul.f32 %v398, %v354
        %v401 = vadd.f32 %v395, %v399
        %v402 = vadd.f32 %v396, %v400
        %vm405 = vcmask 1040384
        %v406 = vrot.slane %v369, 7
        %v407 = vrot.slane %v370, 7
        %v408 = vsel %vm405, %v406, %v407
        %v411 = vsel %vm405, 0.0, %v406
        %v412 = vadd.f32 %v385, %v411
        %v413 = vadd.f32 %v386, %v408
        %vm416 = vcmask 1046528
        %v417 = vrot.slane %v401, 1
        %v418 = vrot.slane %v402, 1
        %v419 = vsel %vm416, %v417, %v418
        %v422 = vsel %vm416, %v418, 0.0
        %v423 = vadd.f32 %v412, %v419
        %v424 = vadd.f32 %v413, %v422
        %s425 = sld [smem:[#allocation8]]
        %v426 = vstv %s425
        %v427 = vadd.f32 %v423, %v426
        %v428 = vadd.f32 %v424, %v426
        %v429 = vmax.f32 %v427, 0.0
        %v430 = vmax.f32 %v428, 0.0
        %s431 = sld [smem:[#allocation9]]
        %v432 = vstv %s431
        %v433 = vmul.f32 %v429, %v432
        %v434 = vmul.f32 %v430, %v432
        %s435 = sld [smem:[#allocation9 + $0x1]]
        %v436 = vstv %s435
        %v437 = vmul.f32 %v429, %v436
        %v438 = vmul.f32 %v430, %v436
        %s439 = sld [smem:[#allocation9 + $0x2]]
        %v440 = vstv %s439
        %v441 = vmul.f32 %v429, %v440
        %v442 = vmul.f32 %v430, %v440
        %s443 = sld [smem:[#allocation9 + $0x3]]
        %v444 = vstv %s443
        %v445 = vmul.f32 %v429, %v444
        %v446 = vmul.f32 %v430, %v444
        %s447 = sld [smem:[#allocation9 + $0x4]]
        %v448 = vstv %s447
        %v449 = vmul.f32 %v429, %v448
        %v450 = vmul.f32 %v430, %v448
        %s451 = sld [smem:[#allocation9 + $0x5]]
        %v452 = vstv %s451
        %v453 = vmul.f32 %v429, %v452
        %v454 = vmul.f32 %v430, %v452
        %s455 = sld [smem:[#allocation9 + $0x6]]
        %v456 = vstv %s455
        %v457 = vmul.f32 %v429, %v456
        %v458 = vmul.f32 %v430, %v456
        %s459 = sld [smem:[#allocation9 + $0x7]]
        %v460 = vstv %s459
        %v461 = vmul.f32 %v429, %v460
        %v462 = vmul.f32 %v430, %v460
        %s463 = sld [smem:[#allocation12]]
        %v464 = vstv %s463
        %v465 = vmul.f32 %v333, %v464
        %v466 = vmul.f32 %v334, %v464
        %s467 = sld [smem:[#allocation12 + $0x1]]
        %v468 = vstv %s467
        %v469 = vmul.f32 %v333, %v468
        %v470 = vmul.f32 %v334, %v468
        %s471 = sld [smem:[#allocation12 + $0x2]]
        %v472 = vstv %s471
        %v473 = vmul.f32 %v333, %v472
        %v474 = vmul.f32 %v334, %v472
        %s475 = sld [smem:[#allocation12 + $0x3]]
        %v476 = vstv %s475
        %v477 = vmul.f32 %v333, %v476
        %v478 = vmul.f32 %v334, %v476
        %s479 = sld [smem:[#allocation12 + $0x4]]
        %v480 = vstv %s479
        %v481 = vmul.f32 %v333, %v480
        %v482 = vmul.f32 %v334, %v480
        %s483 = sld [smem:[#allocation12 + $0x5]]
        %v484 = vstv %s483
        %v485 = vmul.f32 %v333, %v484
        %v486 = vmul.f32 %v334, %v484
        %s487 = sld [smem:[#allocation12 + $0x6]]
        %v488 = vstv %s487
        %v489 = vmul.f32 %v333, %v488
        %v490 = vmul.f32 %v334, %v488
        %s491 = sld [smem:[#allocation12 + $0x7]]
        %v492 = vstv %s491
        %v493 = vmul.f32 %v333, %v492
        %v494 = vmul.f32 %v334, %v492
        %s495 = scalar_lea.vmem %s283, 16 [#allocation2]
        %v496 = vld [vmem:[%s495] sm:$0xff]
        %v497 = vld [vmem:[%s495 + $0x8] sm:$0xff]
        %500 = vrot.lane.b32.xlu0 %v496, 1
        %v501 = vpop.permute.xlu0 %500
        %502 = vrot.lane.b32.xlu0 %v497, 1
        %v503 = vpop.permute.xlu0 %502
        %v506 = vsel %vm343, 0.0, %v501
        %v507 = vsel %vm343, 0.0, %v503
        %508 = vrot.lane.b32.xlu0 %v496, 127
        %v509 = vpop.permute.xlu0 %508
        %510 = vrot.lane.b32.xlu0 %v497, 127
        %v511 = vpop.permute.xlu0 %510
        %v514 = vsel %vm352, %v509, 0.0
        %v515 = vsel %vm352, %v511, 0.0
        %s516 = sld [smem:[#allocation7 + $0x80]]
        %v517 = vstv %s516
        %v518 = vmul.f32 %v517, %v506
        %v519 = vmul.f32 %v517, %v507
        %s520 = sld [smem:[#allocation7 + $0x81]]
        %v521 = vstv %s520
        %v522 = vmul.f32 %v521, %v496
        %v523 = vmul.f32 %v521, %v497
        %v524 = vadd.f32 %v518, %v522
        %v525 = vadd.f32 %v519, %v523
        %s526 = sld [smem:[#allocation7 + $0x82]]
        %v527 = vstv %s526
        %v528 = vmul.f32 %v527, %v514
        %v529 = vmul.f32 %v527, %v515
        %v530 = vadd.f32 %v524, %v528
        %v531 = vadd.f32 %v525, %v529
        %s532 = sld [smem:[#allocation7 + $0x83]]
        %v533 = vstv %s532
        %v534 = vmul.f32 %v533, %v506
        %v535 = vmul.f32 %v533, %v507
        %s536 = sld [smem:[#allocation7 + $0x84]]
        %v537 = vstv %s536
        %v538 = vmul.f32 %v537, %v496
        %v539 = vmul.f32 %v537, %v497
        %v540 = vadd.f32 %v534, %v538
        %v541 = vadd.f32 %v535, %v539
        %s542 = sld [smem:[#allocation7 + $0x85]]
        %v543 = vstv %s542
        %v544 = vmul.f32 %v543, %v514
        %v545 = vmul.f32 %v543, %v515
        %v546 = vadd.f32 %v540, %v544
        %v547 = vadd.f32 %v541, %v545
        %s548 = sld [smem:[#allocation7 + $0x86]]
        %v549 = vstv %s548
        %v550 = vmul.f32 %v549, %v506
        %v551 = vmul.f32 %v549, %v507
        %s552 = sld [smem:[#allocation7 + $0x87]]
        %v553 = vstv %s552
        %v554 = vmul.f32 %v553, %v496
        %v555 = vmul.f32 %v553, %v497
        %v556 = vadd.f32 %v550, %v554
        %v557 = vadd.f32 %v551, %v555
        %s558 = sld [smem:[#allocation7 + $0x88]]
        %v559 = vstv %s558
        %v560 = vmul.f32 %v559, %v514
        %v561 = vmul.f32 %v559, %v515
        %v562 = vadd.f32 %v556, %v560
        %v563 = vadd.f32 %v557, %v561
        %v566 = vrot.slane %v530, 7
        %v567 = vrot.slane %v531, 7
        %v568 = vsel %vm405, %v566, %v567
        %v571 = vsel %vm405, 0.0, %v566
        %v572 = vadd.f32 %v546, %v571
        %v573 = vadd.f32 %v547, %v568
        %v576 = vrot.slane %v562, 1
        %v577 = vrot.slane %v563, 1
        %v578 = vsel %vm416, %v576, %v577
        %v581 = vsel %vm416, %v577, 0.0
        %v582 = vadd.f32 %v572, %v578
        %v583 = vadd.f32 %v573, %v581
        %s584 = sld [smem:[#allocation8 + $0x1]]
        %v585 = vstv %s584
        %v586 = vadd.f32 %v582, %v585
        %v587 = vadd.f32 %v583, %v585
        %v588 = vmax.f32 %v586, 0.0
        %v589 = vmax.f32 %v587, 0.0
        %s590 = sld [smem:[#allocation9 + $0x80]]
        %v591 = vstv %s590
        %v592 = vmul.f32 %v588, %v591
        %v593 = vmul.f32 %v589, %v591
        %v594 = vadd.f32 %v433, %v592
        %v595 = vadd.f32 %v434, %v593
        %s596 = sld [smem:[#allocation9 + $0x81]]
        %v597 = vstv %s596
        %v598 = vmul.f32 %v588, %v597
        %v599 = vmul.f32 %v589, %v597
        %v600 = vadd.f32 %v437, %v598
        %v601 = vadd.f32 %v438, %v599
        %s602 = sld [smem:[#allocation9 + $0x82]]
        %v603 = vstv %s602
        %v604 = vmul.f32 %v588, %v603
        %v605 = vmul.f32 %v589, %v603
        %v606 = vadd.f32 %v441, %v604
        %v607 = vadd.f32 %v442, %v605
        %s608 = sld [smem:[#allocation9 + $0x83]]
        %v609 = vstv %s608
        %v610 = vmul.f32 %v588, %v609
        %v611 = vmul.f32 %v589, %v609
        %v612 = vadd.f32 %v445, %v610
        %v613 = vadd.f32 %v446, %v611
        %s614 = sld [smem:[#allocation9 + $0x84]]
        %v615 = vstv %s614
        %v616 = vmul.f32 %v588, %v615
        %v617 = vmul.f32 %v589, %v615
        %v618 = vadd.f32 %v449, %v616
        %v619 = vadd.f32 %v450, %v617
        %s620 = sld [smem:[#allocation9 + $0x85]]
        %v621 = vstv %s620
        %v622 = vmul.f32 %v588, %v621
        %v623 = vmul.f32 %v589, %v621
        %v624 = vadd.f32 %v453, %v622
        %v625 = vadd.f32 %v454, %v623
        %s626 = sld [smem:[#allocation9 + $0x86]]
        %v627 = vstv %s626
        %v628 = vmul.f32 %v588, %v627
        %v629 = vmul.f32 %v589, %v627
        %v630 = vadd.f32 %v457, %v628
        %v631 = vadd.f32 %v458, %v629
        %s632 = sld [smem:[#allocation9 + $0x87]]
        %v633 = vstv %s632
        %v634 = vmul.f32 %v588, %v633
        %v635 = vmul.f32 %v589, %v633
        %v636 = vadd.f32 %v461, %v634
        %v637 = vadd.f32 %v462, %v635
        %s638 = sld [smem:[#allocation12 + $0x80]]
        %v639 = vstv %s638
        %v640 = vmul.f32 %v496, %v639
        %v641 = vmul.f32 %v497, %v639
        %v642 = vadd.f32 %v465, %v640
        %v643 = vadd.f32 %v466, %v641
        %s644 = sld [smem:[#allocation12 + $0x81]]
        %v645 = vstv %s644
        %v646 = vmul.f32 %v496, %v645
        %v647 = vmul.f32 %v497, %v645
        %v648 = vadd.f32 %v469, %v646
        %v649 = vadd.f32 %v470, %v647
        %s650 = sld [smem:[#allocation12 + $0x82]]
        %v651 = vstv %s650
        %v652 = vmul.f32 %v496, %v651
        %v653 = vmul.f32 %v497, %v651
        %v654 = vadd.f32 %v473, %v652
        %v655 = vadd.f32 %v474, %v653
        %s656 = sld [smem:[#allocation12 + $0x83]]
        %v657 = vstv %s656
        %v658 = vmul.f32 %v496, %v657
        %v659 = vmul.f32 %v497, %v657
        %v660 = vadd.f32 %v477, %v658
        %v661 = vadd.f32 %v478, %v659
        %s662 = sld [smem:[#allocation12 + $0x84]]
        %v663 = vstv %s662
        %v664 = vmul.f32 %v496, %v663
        %v665 = vmul.f32 %v497, %v663
        %v666 = vadd.f32 %v481, %v664
        %v667 = vadd.f32 %v482, %v665
        %s668 = sld [smem:[#allocation12 + $0x85]]
        %v669 = vstv %s668
        %v670 = vmul.f32 %v496, %v669
        %v671 = vmul.f32 %v497, %v669
        %v672 = vadd.f32 %v485, %v670
        %v673 = vadd.f32 %v486, %v671
        %s674 = sld [smem:[#allocation12 + $0x86]]
        %v675 = vstv %s674
        %v676 = vmul.f32 %v496, %v675
        %v677 = vmul.f32 %v497, %v675
        %v678 = vadd.f32 %v489, %v676
        %v679 = vadd.f32 %v490, %v677
        %s680 = sld [smem:[#allocation12 + $0x87]]
        %v681 = vstv %s680
        %v682 = vmul.f32 %v496, %v681
        %v683 = vmul.f32 %v497, %v681
        %v684 = vadd.f32 %v493, %v682
        %v685 = vadd.f32 %v494, %v683
        %s686 = scalar_lea.vmem %s283, 32 [#allocation2]
        %v687 = vld [vmem:[%s686] sm:$0xff]
        %v688 = vld [vmem:[%s686 + $0x8] sm:$0xff]
        %691 = vrot.lane.b32.xlu0 %v687, 1
        %v692 = vpop.permute.xlu0 %691
        %693 = vrot.lane.b32.xlu0 %v688, 1
        %v694 = vpop.permute.xlu0 %693
        %v697 = vsel %vm343, 0.0, %v692
        %v698 = vsel %vm343, 0.0, %v694
        %699 = vrot.lane.b32.xlu0 %v687, 127
        %v700 = vpop.permute.xlu0 %699
        %701 = vrot.lane.b32.xlu0 %v688, 127
        %v702 = vpop.permute.xlu0 %701
        %v705 = vsel %vm352, %v700, 0.0
        %v706 = vsel %vm352, %v702, 0.0
        %s707 = sld [smem:[#allocation7 + $0x100]]
        %v708 = vstv %s707
        %v709 = vmul.f32 %v708, %v697
        %v710 = vmul.f32 %v708, %v698
        %s711 = sld [smem:[#allocation7 + $0x101]]
        %v712 = vstv %s711
        %v713 = vmul.f32 %v712, %v687
        %v714 = vmul.f32 %v712, %v688
        %v715 = vadd.f32 %v709, %v713
        %v716 = vadd.f32 %v710, %v714
        %s717 = sld [smem:[#allocation7 + $0x102]]
        %v718 = vstv %s717
        %v719 = vmul.f32 %v718, %v705
        %v720 = vmul.f32 %v718, %v706
        %v721 = vadd.f32 %v715, %v719
        %v722 = vadd.f32 %v716, %v720
        %s723 = sld [smem:[#allocation7 + $0x103]]
        %v724 = vstv %s723
        %v725 = vmul.f32 %v724, %v697
        %v726 = vmul.f32 %v724, %v698
        %s727 = sld [smem:[#allocation7 + $0x104]]
        %v728 = vstv %s727
        %v729 = vmul.f32 %v728, %v687
        %v730 = vmul.f32 %v728, %v688
        %v731 = vadd.f32 %v725, %v729
        %v732 = vadd.f32 %v726, %v730
        %s733 = sld [smem:[#allocation7 + $0x105]]
        %v734 = vstv %s733
        %v735 = vmul.f32 %v734, %v705
        %v736 = vmul.f32 %v734, %v706
        %v737 = vadd.f32 %v731, %v735
        %v738 = vadd.f32 %v732, %v736
        %s739 = sld [smem:[#allocation7 + $0x106]]
        %v740 = vstv %s739
        %v741 = vmul.f32 %v740, %v697
        %v742 = vmul.f32 %v740, %v698
        %s743 = sld [smem:[#allocation7 + $0x107]]
        %v744 = vstv %s743
        %v745 = vmul.f32 %v744, %v687
        %v746 = vmul.f32 %v744, %v688
        %v747 = vadd.f32 %v741, %v745
        %v748 = vadd.f32 %v742, %v746
        %s749 = sld [smem:[#allocation7 + $0x108]]
        %v750 = vstv %s749
        %v751 = vmul.f32 %v750, %v705
        %v752 = vmul.f32 %v750, %v706
        %v753 = vadd.f32 %v747, %v751
        %v754 = vadd.f32 %v748, %v752
        %v757 = vrot.slane %v721, 7
        %v758 = vrot.slane %v722, 7
        %v759 = vsel %vm405, %v757, %v758
        %v762 = vsel %vm405, 0.0, %v757
        %v763 = vadd.f32 %v737, %v762
        %v764 = vadd.f32 %v738, %v759
        %v767 = vrot.slane %v753, 1
        %v768 = vrot.slane %v754, 1
        %v769 = vsel %vm416, %v767, %v768
        %v772 = vsel %vm416, %v768, 0.0
        %v773 = vadd.f32 %v763, %v769
        %v774 = vadd.f32 %v764, %v772
        %s775 = sld [smem:[#allocation8 + $0x2]]
        %v776 = vstv %s775
        %v777 = vadd.f32 %v773, %v776
        %v778 = vadd.f32 %v774, %v776
        %v779 = vmax.f32 %v777, 0.0
        %v780 = vmax.f32 %v778, 0.0
        %s781 = sld [smem:[#allocation9 + $0x100]]
        %v782 = vstv %s781
        %v783 = vmul.f32 %v779, %v782
        %v784 = vmul.f32 %v780, %v782
        %v785 = vadd.f32 %v594, %v783
        %v786 = vadd.f32 %v595, %v784
        %s787 = sld [smem:[#allocation9 + $0x101]]
        %v788 = vstv %s787
        %v789 = vmul.f32 %v779, %v788
        %v790 = vmul.f32 %v780, %v788
        %v791 = vadd.f32 %v600, %v789
        %v792 = vadd.f32 %v601, %v790
        %s793 = sld [smem:[#allocation9 + $0x102]]
        %v794 = vstv %s793
        %v795 = vmul.f32 %v779, %v794
        %v796 = vmul.f32 %v780, %v794
        %v797 = vadd.f32 %v606, %v795
        %v798 = vadd.f32 %v607, %v796
        %s799 = sld [smem:[#allocation9 + $0x103]]
        %v800 = vstv %s799
        %v801 = vmul.f32 %v779, %v800
        %v802 = vmul.f32 %v780, %v800
        %v803 = vadd.f32 %v612, %v801
        %v804 = vadd.f32 %v613, %v802
        %s805 = sld [smem:[#allocation9 + $0x104]]
        %v806 = vstv %s805
        %v807 = vmul.f32 %v779, %v806
        %v808 = vmul.f32 %v780, %v806
        %v809 = vadd.f32 %v618, %v807
        %v810 = vadd.f32 %v619, %v808
        %s811 = sld [smem:[#allocation9 + $0x105]]
        %v812 = vstv %s811
        %v813 = vmul.f32 %v779, %v812
        %v814 = vmul.f32 %v780, %v812
        %v815 = vadd.f32 %v624, %v813
        %v816 = vadd.f32 %v625, %v814
        %s817 = sld [smem:[#allocation9 + $0x106]]
        %v818 = vstv %s817
        %v819 = vmul.f32 %v779, %v818
        %v820 = vmul.f32 %v780, %v818
        %v821 = vadd.f32 %v630, %v819
        %v822 = vadd.f32 %v631, %v820
        %s823 = sld [smem:[#allocation9 + $0x107]]
        %v824 = vstv %s823
        %v825 = vmul.f32 %v779, %v824
        %v826 = vmul.f32 %v780, %v824
        %v827 = vadd.f32 %v636, %v825
        %v828 = vadd.f32 %v637, %v826
        %s829 = sld [smem:[#allocation12 + $0x100]]
        %v830 = vstv %s829
        %v831 = vmul.f32 %v687, %v830
        %v832 = vmul.f32 %v688, %v830
        %v833 = vadd.f32 %v642, %v831
        %v834 = vadd.f32 %v643, %v832
        %s835 = sld [smem:[#allocation12 + $0x101]]
        %v836 = vstv %s835
        %v837 = vmul.f32 %v687, %v836
        %v838 = vmul.f32 %v688, %v836
        %v839 = vadd.f32 %v648, %v837
        %v840 = vadd.f32 %v649, %v838
        %s841 = sld [smem:[#allocation12 + $0x102]]
        %v842 = vstv %s841
        %v843 = vmul.f32 %v687, %v842
        %v844 = vmul.f32 %v688, %v842
        %v845 = vadd.f32 %v654, %v843
        %v846 = vadd.f32 %v655, %v844
        %s847 = sld [smem:[#allocation12 + $0x103]]
        %v848 = vstv %s847
        %v849 = vmul.f32 %v687, %v848
        %v850 = vmul.f32 %v688, %v848
        %v851 = vadd.f32 %v660, %v849
        %v852 = vadd.f32 %v661, %v850
        %s853 = sld [smem:[#allocation12 + $0x104]]
        %v854 = vstv %s853
        %v855 = vmul.f32 %v687, %v854
        %v856 = vmul.f32 %v688, %v854
        %v857 = vadd.f32 %v666, %v855
        %v858 = vadd.f32 %v667, %v856
        %s859 = sld [smem:[#allocation12 + $0x105]]
        %v860 = vstv %s859
        %v861 = vmul.f32 %v687, %v860
        %v862 = vmul.f32 %v688, %v860
        %v863 = vadd.f32 %v672, %v861
        %v864 = vadd.f32 %v673, %v862
        %s865 = sld [smem:[#allocation12 + $0x106]]
        %v866 = vstv %s865
        %v867 = vmul.f32 %v687, %v866
        %v868 = vmul.f32 %v688, %v866
        %v869 = vadd.f32 %v678, %v867
        %v870 = vadd.f32 %v679, %v868
        %s871 = sld [smem:[#allocation12 + $0x107]]
        %v872 = vstv %s871
        %v873 = vmul.f32 %v687, %v872
        %v874 = vmul.f32 %v688, %v872
        %v875 = vadd.f32 %v684, %v873
        %v876 = vadd.f32 %v685, %v874
        %s877 = scalar_lea.vmem %s283, 48 [#allocation2]
        %v878 = vld [vmem:[%s877] sm:$0xff]
        %v879 = vld [vmem:[%s877 + $0x8] sm:$0xff]
        %882 = vrot.lane.b32.xlu0 %v878, 1
        %v883 = vpop.permute.xlu0 %882
        %884 = vrot.lane.b32.xlu0 %v879, 1
        %v885 = vpop.permute.xlu0 %884
        %v888 = vsel %vm343, 0.0, %v883
        %v889 = vsel %vm343, 0.0, %v885
        %890 = vrot.lane.b32.xlu0 %v878, 127
        %v891 = vpop.permute.xlu0 %890
        %892 = vrot.lane.b32.xlu0 %v879, 127
        %v893 = vpop.permute.xlu0 %892
        %v896 = vsel %vm352, %v891, 0.0
        %v897 = vsel %vm352, %v893, 0.0
        %s898 = sld [smem:[#allocation7 + $0x180]]
        %v899 = vstv %s898
        %v900 = vmul.f32 %v899, %v888
        %v901 = vmul.f32 %v899, %v889
        %s902 = sld [smem:[#allocation7 + $0x181]]
        %v903 = vstv %s902
        %v904 = vmul.f32 %v903, %v878
        %v905 = vmul.f32 %v903, %v879
        %v906 = vadd.f32 %v900, %v904
        %v907 = vadd.f32 %v901, %v905
        %s908 = sld [smem:[#allocation7 + $0x182]]
        %v909 = vstv %s908
        %v910 = vmul.f32 %v909, %v896
        %v911 = vmul.f32 %v909, %v897
        %v912 = vadd.f32 %v906, %v910
        %v913 = vadd.f32 %v907, %v911
        %s914 = sld [smem:[#allocation7 + $0x183]]
        %v915 = vstv %s914
        %v916 = vmul.f32 %v915, %v888
        %v917 = vmul.f32 %v915, %v889
        %s918 = sld [smem:[#allocation7 + $0x184]]
        %v919 = vstv %s918
        %v920 = vmul.f32 %v919, %v878
        %v921 = vmul.f32 %v919, %v879
        %v922 = vadd.f32 %v916, %v920
        %v923 = vadd.f32 %v917, %v921
        %s924 = sld [smem:[#allocation7 + $0x185]]
        %v925 = vstv %s924
        %v926 = vmul.f32 %v925, %v896
        %v927 = vmul.f32 %v925, %v897
        %v928 = vadd.f32 %v922, %v926
        %v929 = vadd.f32 %v923, %v927
        %s930 = sld [smem:[#allocation7 + $0x186]]
        %v931 = vstv %s930
        %v932 = vmul.f32 %v931, %v888
        %v933 = vmul.f32 %v931, %v889
        %s934 = sld [smem:[#allocation7 + $0x187]]
        %v935 = vstv %s934
        %v936 = vmul.f32 %v935, %v878
        %v937 = vmul.f32 %v935, %v879
        %v938 = vadd.f32 %v932, %v936
        %v939 = vadd.f32 %v933, %v937
        %s940 = sld [smem:[#allocation7 + $0x188]]
        %v941 = vstv %s940
        %v942 = vmul.f32 %v941, %v896
        %v943 = vmul.f32 %v941, %v897
        %v944 = vadd.f32 %v938, %v942
        %v945 = vadd.f32 %v939, %v943
        %v948 = vrot.slane %v912, 7
        %v949 = vrot.slane %v913, 7
        %v950 = vsel %vm405, %v948, %v949
        %v953 = vsel %vm405, 0.0, %v948
        %v954 = vadd.f32 %v928, %v953
        %v955 = vadd.f32 %v929, %v950
        %v958 = vrot.slane %v944, 1
        %v959 = vrot.slane %v945, 1
        %v960 = vsel %vm416, %v958, %v959
        %v963 = vsel %vm416, %v959, 0.0
        %v964 = vadd.f32 %v954, %v960
        %v965 = vadd.f32 %v955, %v963
        %s966 = sld [smem:[#allocation8 + $0x3]]
        %v967 = vstv %s966
        %v968 = vadd.f32 %v964, %v967
        %v969 = vadd.f32 %v965, %v967
        %v970 = vmax.f32 %v968, 0.0
        %v971 = vmax.f32 %v969, 0.0
        %s972 = sld [smem:[#allocation9 + $0x180]]
        %v973 = vstv %s972
        %v974 = vmul.f32 %v970, %v973
        %v975 = vmul.f32 %v971, %v973
        %v976 = vadd.f32 %v785, %v974
        %v977 = vadd.f32 %v786, %v975
        %s978 = sld [smem:[#allocation9 + $0x181]]
        %v979 = vstv %s978
        %v980 = vmul.f32 %v970, %v979
        %v981 = vmul.f32 %v971, %v979
        %v982 = vadd.f32 %v791, %v980
        %v983 = vadd.f32 %v792, %v981
        %s984 = sld [smem:[#allocation9 + $0x182]]
        %v985 = vstv %s984
        %v986 = vmul.f32 %v970, %v985
        %v987 = vmul.f32 %v971, %v985
        %v988 = vadd.f32 %v797, %v986
        %v989 = vadd.f32 %v798, %v987
        %s990 = sld [smem:[#allocation9 + $0x183]]
        %v991 = vstv %s990
        %v992 = vmul.f32 %v970, %v991
        %v993 = vmul.f32 %v971, %v991
        %v994 = vadd.f32 %v803, %v992
        %v995 = vadd.f32 %v804, %v993
        %s996 = sld [smem:[#allocation9 + $0x184]]
        %v997 = vstv %s996
        %v998 = vmul.f32 %v970, %v997
        %v999 = vmul.f32 %v971, %v997
        %v1000 = vadd.f32 %v809, %v998
        %v1001 = vadd.f32 %v810, %v999
        %s1002 = sld [smem:[#allocation9 + $0x185]]
        %v1003 = vstv %s1002
        %v1004 = vmul.f32 %v970, %v1003
        %v1005 = vmul.f32 %v971, %v1003
        %v1006 = vadd.f32 %v815, %v1004
        %v1007 = vadd.f32 %v816, %v1005
        %s1008 = sld [smem:[#allocation9 + $0x186]]
        %v1009 = vstv %s1008
        %v1010 = vmul.f32 %v970, %v1009
        %v1011 = vmul.f32 %v971, %v1009
        %v1012 = vadd.f32 %v821, %v1010
        %v1013 = vadd.f32 %v822, %v1011
        %s1014 = sld [smem:[#allocation9 + $0x187]]
        %v1015 = vstv %s1014
        %v1016 = vmul.f32 %v970, %v1015
        %v1017 = vmul.f32 %v971, %v1015
        %v1018 = vadd.f32 %v827, %v1016
        %v1019 = vadd.f32 %v828, %v1017
        %s1020 = sld [smem:[#allocation12 + $0x180]]
        %v1021 = vstv %s1020
        %v1022 = vmul.f32 %v878, %v1021
        %v1023 = vmul.f32 %v879, %v1021
        %v1024 = vadd.f32 %v833, %v1022
        %v1025 = vadd.f32 %v834, %v1023
        %s1026 = sld [smem:[#allocation12 + $0x181]]
        %v1027 = vstv %s1026
        %v1028 = vmul.f32 %v878, %v1027
        %v1029 = vmul.f32 %v879, %v1027
        %v1030 = vadd.f32 %v839, %v1028
        %v1031 = vadd.f32 %v840, %v1029
        %s1032 = sld [smem:[#allocation12 + $0x182]]
        %v1033 = vstv %s1032
        %v1034 = vmul.f32 %v878, %v1033
        %v1035 = vmul.f32 %v879, %v1033
        %v1036 = vadd.f32 %v845, %v1034
        %v1037 = vadd.f32 %v846, %v1035
        %s1038 = sld [smem:[#allocation12 + $0x183]]
        %v1039 = vstv %s1038
        %v1040 = vmul.f32 %v878, %v1039
        %v1041 = vmul.f32 %v879, %v1039
        %v1042 = vadd.f32 %v851, %v1040
        %v1043 = vadd.f32 %v852, %v1041
        %s1044 = sld [smem:[#allocation12 + $0x184]]
        %v1045 = vstv %s1044
        %v1046 = vmul.f32 %v878, %v1045
        %v1047 = vmul.f32 %v879, %v1045
        %v1048 = vadd.f32 %v857, %v1046
        %v1049 = vadd.f32 %v858, %v1047
        %s1050 = sld [smem:[#allocation12 + $0x185]]
        %v1051 = vstv %s1050
        %v1052 = vmul.f32 %v878, %v1051
        %v1053 = vmul.f32 %v879, %v1051
        %v1054 = vadd.f32 %v863, %v1052
        %v1055 = vadd.f32 %v864, %v1053
        %s1056 = sld [smem:[#allocation12 + $0x186]]
        %v1057 = vstv %s1056
        %v1058 = vmul.f32 %v878, %v1057
        %v1059 = vmul.f32 %v879, %v1057
        %v1060 = vadd.f32 %v869, %v1058
        %v1061 = vadd.f32 %v870, %v1059
        %s1062 = sld [smem:[#allocation12 + $0x187]]
        %v1063 = vstv %s1062
        %v1064 = vmul.f32 %v878, %v1063
        %v1065 = vmul.f32 %v879, %v1063
        %v1066 = vadd.f32 %v875, %v1064
        %v1067 = vadd.f32 %v876, %v1065
        %s1068 = sld [smem:[#allocation11]]
        %v1069 = vstv %s1068
        %v1070 = vadd.f32 %v976, %v1069
        %v1071 = vadd.f32 %v977, %v1069
        %v1072 = vadd.f32 %v1070, %v1024
        %v1073 = vadd.f32 %v1071, %v1025
        %v1074 = vmax.f32 %v1072, 0.0
        %v1075 = vmax.f32 %v1073, 0.0
        %vm1076 = vcmask 130048
        %1077 = vst.msk [vmem:[%s332] sm:$0xff] %vm1076, %v1074
        %1078 = vst.msk [vmem:[%s332 + $0x8] sm:$0xff] %vm1076, %v1075
        %s1079 = sld [smem:[#allocation11 + $0x1]]
        %v1080 = vstv %s1079
        %v1081 = vadd.f32 %v982, %v1080
        %v1082 = vadd.f32 %v983, %v1080
        %v1083 = vadd.f32 %v1081, %v1030
        %v1084 = vadd.f32 %v1082, %v1031
        %v1085 = vmax.f32 %v1083, 0.0
        %v1086 = vmax.f32 %v1084, 0.0
        %s1087 = scalar_lea.vmem %s332, 16 [#allocation14]
        %1088 = vst.msk [vmem:[%s1087] sm:$0xff] %vm1076, %v1085
        %1089 = vst.msk [vmem:[%s1087 + $0x8] sm:$0xff] %vm1076, %v1086
        %s1090 = sld [smem:[#allocation11 + $0x2]]
        %v1091 = vstv %s1090
        %v1092 = vadd.f32 %v988, %v1091
        %v1093 = vadd.f32 %v989, %v1091
        %v1094 = vadd.f32 %v1092, %v1036
        %v1095 = vadd.f32 %v1093, %v1037
        %v1096 = vmax.f32 %v1094, 0.0
        %v1097 = vmax.f32 %v1095, 0.0
        %s1098 = scalar_lea.vmem %s332, 32 [#allocation14]
        %1099 = vst.msk [vmem:[%s1098] sm:$0xff] %vm1076, %v1096
        %1100 = vst.msk [vmem:[%s1098 + $0x8] sm:$0xff] %vm1076, %v1097
        %s1101 = sld [smem:[#allocation11 + $0x3]]
        %v1102 = vstv %s1101
        %v1103 = vadd.f32 %v994, %v1102
        %v1104 = vadd.f32 %v995, %v1102
        %v1105 = vadd.f32 %v1103, %v1042
        %v1106 = vadd.f32 %v1104, %v1043
        %v1107 = vmax.f32 %v1105, 0.0
        %v1108 = vmax.f32 %v1106, 0.0
        %s1109 = scalar_lea.vmem %s332, 48 [#allocation14]
        %1110 = vst.msk [vmem:[%s1109] sm:$0xff] %vm1076, %v1107
        %1111 = vst.msk [vmem:[%s1109 + $0x8] sm:$0xff] %vm1076, %v1108
        %s1112 = sld [smem:[#allocation11 + $0x4]]
        %v1113 = vstv %s1112
        %v1114 = vadd.f32 %v1000, %v1113
        %v1115 = vadd.f32 %v1001, %v1113
        %v1116 = vadd.f32 %v1114, %v1048
        %v1117 = vadd.f32 %v1115, %v1049
        %v1118 = vmax.f32 %v1116, 0.0
        %v1119 = vmax.f32 %v1117, 0.0
        %s1120 = scalar_lea.vmem %s332, 64 [#allocation14]
        %1121 = vst.msk [vmem:[%s1120] sm:$0xff] %vm1076, %v1118
        %1122 = vst.msk [vmem:[%s1120 + $0x8] sm:$0xff] %vm1076, %v1119
        %s1123 = sld [smem:[#allocation11 + $0x5]]
        %v1124 = vstv %s1123
        %v1125 = vadd.f32 %v1006, %v1124
        %v1126 = vadd.f32 %v1007, %v1124
        %v1127 = vadd.f32 %v1125, %v1054
        %v1128 = vadd.f32 %v1126, %v1055
        %v1129 = vmax.f32 %v1127, 0.0
        %v1130 = vmax.f32 %v1128, 0.0
        %s1131 = scalar_lea.vmem %s332, 80 [#allocation14]
        %1132 = vst.msk [vmem:[%s1131] sm:$0xff] %vm1076, %v1129
        %1133 = vst.msk [vmem:[%s1131 + $0x8] sm:$0xff] %vm1076, %v1130
        %s1134 = sld [smem:[#allocation11 + $0x6]]
        %v1135 = vstv %s1134
        %v1136 = vadd.f32 %v1012, %v1135
        %v1137 = vadd.f32 %v1013, %v1135
        %v1138 = vadd.f32 %v1136, %v1060
        %v1139 = vadd.f32 %v1137, %v1061
        %v1140 = vmax.f32 %v1138, 0.0
        %v1141 = vmax.f32 %v1139, 0.0
        %s1142 = scalar_lea.vmem %s332, 96 [#allocation14]
        %1143 = vst.msk [vmem:[%s1142] sm:$0xff] %vm1076, %v1140
        %1144 = vst.msk [vmem:[%s1142 + $0x8] sm:$0xff] %vm1076, %v1141
        %s1145 = sld [smem:[#allocation11 + $0x7]]
        %v1146 = vstv %s1145
        %v1147 = vadd.f32 %v1018, %v1146
        %v1148 = vadd.f32 %v1019, %v1146
        %v1149 = vadd.f32 %v1147, %v1066
        %v1150 = vadd.f32 %v1148, %v1067
        %v1151 = vmax.f32 %v1149, 0.0
        %v1152 = vmax.f32 %v1150, 0.0
        %s1153 = scalar_lea.vmem %s332, 112 [#allocation14]
        %1154 = vst.msk [vmem:[%s1153] sm:$0xff] %vm1076, %v1151
        %1155 = vst.msk [vmem:[%s1153 + $0x8] sm:$0xff] %vm1076, %v1152
        %s1156 = sand.u32 %s166, 1
        %s1157 = scalar_lea.sflag [#allocation4], %s1156
        %s1158 = sand.u32 %s166, 1
        %s1159 = smul.addr %s1158, 128
        %s1160 = scalar_lea.vmem [#allocation14], %s1159
        // Predicated region
        $region69: #{tpu_custom_call.1} parent=43 // pred_check
          %p1161 = pneg %p176
        $region70: #{tpu_custom_call.1} parent=43 // pred_check_branch
          %1163 = sbr.rel (%p1161) target = $region72
        $region71: #{tpu_custom_call.1} parent=43 // pred_region
          %s1165 = ssub.s32 2048, 2048
          %1166 = vsyncadd %s1157, %s1165
          %s1167 = smul.addr %s27, 16
          %s1168 = smul.addr %s1167, 128
          %s1169 = scalar_lea.hbm %s6, %s1168
          %s1170 = sshll.u32 %s1160, 4
          %s1171 = int_to_ptr.vmem [resolvable:$true] %s1170
          %1176 = dma.vmem_to_hbm [thread:$0]  %s1171, 2048, %s1169, %s1157, 128, 128, 8
        $region72: #{tpu_custom_call.1} parent=43 // pred_fallthru
          _
      $region44: #{tpu_custom_call.1} parent=5 // pred_fallthru
        _
      %p1177 = scmp.le.s32.totalorder 2, %s22
      // Predicated region
      $region73: #{tpu_custom_call.1} parent=5 // pred_check
        %p1178 = pneg %p1177
      $region74: #{tpu_custom_call.1} parent=5 // pred_check_branch
        %1180 = sbr.rel (%p1178) target = $region76
      $region75: #{tpu_custom_call.1} parent=5 // pred_region
        %s1181 = ssub.s32 %s22, 2
        // Predicated region
        $region77: #{tpu_custom_call.1} parent=75 // pred_check
          %p1182 = pneg %p182
        $region78: #{tpu_custom_call.1} parent=75 // pred_check_branch
          %1184 = sbr.rel (%p1182) target = $region80
        $region79: #{tpu_custom_call.1} parent=75 // pred_region
          %s1185 = sand.u32 %s167, 1
          %s1186 = scalar_lea.sflag [#allocation4], %s1185
          %s1187 = sand.u32 %s167, 1
          %s1188 = smul.addr %s1187, 128
          %s1189 = scalar_lea.vmem [#allocation14], %s1188
          %1190 = dma.done %s1186, 2048
        $region80: #{tpu_custom_call.1} parent=75 // pred_fallthru
          _
      $region76: #{tpu_custom_call.1} parent=5 // pred_fallthru
        _
    $region6: #{tpu_custom_call.1} parent=1 // loop_footer
      %s26 = sadd.s32 1, %s22
    $region7: #{tpu_custom_call.1} parent=1 // loop_footer_branch
      %21 = sbr.rel target = $region3
    $region8: #{tpu_custom_call.1} parent=1 // loop_exit
      _
    %1191 = vsyncpa [#allocation3], 1
    %s1192 = scalar_lea.sflag [#allocation3], 1
    %1193 = vsyncpa %s1192, 1
    %1194 = vsyncpa [#allocation4], 1
    %s1195 = scalar_lea.sflag [#allocation4], 1
    %1196 = vsyncpa %s1195, 1
    %1197 = vsyncpa [#allocation5], 1
    %s1198 = scalar_lea.sflag [#allocation5], 1
    %1199 = vsyncpa %s1198, 1
    %1200 = vsyncpa [#allocation6], 1
    %s1201 = scalar_lea.sflag [#allocation6], 1
    %1202 = vsyncpa %s1201, 1
    %1203 = vsyncpa [#allocation10], 1
    %1204 = vsyncpa [#allocation13], 1

</llo_original>
